<compile_context>
chip_gen: v7x
topology: tpu7x:2x2x1
jax: 0.10.0
libtpu: 0.0.40
codegen_flags: <defaults>
</compile_context>

<pallas_src>
import functools

import jax
import jax.numpy as jnp
from jax import lax
from jax.experimental import pallas as pl
from jax.experimental.pallas import tpu as pltpu


def _layer_norm(x, gamma, beta, eps=1e-5):
    mean = jnp.mean(x, axis=-1, keepdims=True)
    var = jnp.mean((x - mean) ** 2, axis=-1, keepdims=True)
    return (x - mean) * lax.rsqrt(var + eps) * gamma + beta


def decoder_stack_kernel(
    x_ref,                                   # (1, L, D)  f32 embedded input
    ln1_w_ref, ln1_b_ref,                    # (1, 1, D)  f32
    wq_ref, wk_ref, wv_ref,                  # (1, H, D, Dh) bf16
    bq_ref, bk_ref, bv_ref,                  # (1, H, 1, Dh) f32
    wo_ref, bo_ref,                          # (1, H, Dh, D) bf16, (1, 1, D) f32
    ln2_w_ref, ln2_b_ref,                    # (1, 1, D) f32
    w1_ref, b1_ref,                          # (1, D, M) bf16, (1, 1, M) f32
    w2_ref, b2_ref,                          # (1, M, D) bf16, (1, 1, D) f32
    y_ref,                                   # (1, L, D)  f32 final activations
    x_sc,                                    # VMEM (L, D) f32, carried over layers
    *, n_heads, with_residuals):
    layer = pl.program_id(1)
    n_layers = pl.num_programs(1)
    L, D = x_sc.shape
    H = n_heads
    Dh = D // H
    scale = 1.0 / (Dh ** 0.5)

    @pl.when(layer == 0)
    def _():
        x_sc[...] = x_ref[0].astype(jnp.float32)

    x = x_sc[...]                                                 # (L, D) f32

    # ---------------- causal self-attention (batched over heads) ------------
    h = _layer_norm(x, ln1_w_ref[0, 0], ln1_b_ref[0, 0])
    hb = jnp.broadcast_to(h.astype(jnp.bfloat16), (H, L, D))      # (H, L, D)

    q = jnp.einsum('hld,hdk->hlk', hb, wq_ref[0],
                   preferred_element_type=jnp.float32) + bq_ref[0]
    k = jnp.einsum('hld,hdk->hlk', hb, wk_ref[0],
                   preferred_element_type=jnp.float32) + bk_ref[0]
    v = jnp.einsum('hld,hdk->hlk', hb, wv_ref[0],
                   preferred_element_type=jnp.float32) + bv_ref[0]

    row = lax.broadcasted_iota(jnp.int32, (L, L), 0)
    col = lax.broadcasted_iota(jnp.int32, (L, L), 1)
    causal = (col <= row)[None, :, :]                              # (1, L, L)

    s = jnp.einsum('hqd,hkd->hqk', q.astype(jnp.bfloat16),
                   k.astype(jnp.bfloat16),
                   preferred_element_type=jnp.float32) * scale     # (H, L, L)
    s = jnp.where(causal, s, -1e30)                                # f32 mask path
    s = s - jnp.max(s, axis=-1, keepdims=True)
    e = jnp.exp(s)
    p = e * pl.reciprocal(jnp.sum(e, axis=-1, keepdims=True), approx=True)

    o = jnp.einsum('hqk,hkd->hqd', p.astype(jnp.bfloat16),
                   v.astype(jnp.bfloat16),
                   preferred_element_type=jnp.float32)             # (H, L, Dh)
    attn = jnp.sum(
        jnp.einsum('hld,hdk->hlk', o.astype(jnp.bfloat16), wo_ref[0],
                   preferred_element_type=jnp.float32),
        axis=0) + bo_ref[0, 0]                                     # (L, D)

    if with_residuals:
        x = x + attn
        res = x
    else:
        x = attn
        res = None

    # ---------------- MLP ----------------------------------------------------
    h = _layer_norm(x, ln2_w_ref[0, 0], ln2_b_ref[0, 0])
    h = jnp.dot(h.astype(jnp.bfloat16), w1_ref[0],
                preferred_element_type=jnp.float32) + b1_ref[0, 0]
    h = jax.nn.gelu(h, approximate=True)
    h = jnp.dot(h.astype(jnp.bfloat16), w2_ref[0],
                preferred_element_type=jnp.float32) + b2_ref[0, 0]
    x = (res + h) if with_residuals else h

    x_sc[...] = x

    @pl.when(layer == n_layers - 1)
    def _():
        y_ref[0] = x.astype(y_ref.dtype)


def lm_head_kernel(x_ref, lnf_w_ref, lnf_b_ref, wp_ref, bp_ref, out_ref):
    x = x_ref[0].astype(jnp.float32)                               # (L, D)
    h = _layer_norm(x, lnf_w_ref[...], lnf_b_ref[...])
    logits = jnp.dot(h.astype(jnp.bfloat16), wp_ref[...],
                     preferred_element_type=jnp.float32) + bp_ref[...]
    out_ref[0] = logits.astype(out_ref.dtype)


def _vocab_tile(V):
    for t in (512, 256, 128):
        if V % t == 0:
            return t
    return V


def transformer_lm_forward(ids, p, cfg):
    B, L = ids.shape
    D, V = cfg["embed"], cfg["vocab"]
    N, H, M = cfg["n_layers"], cfg["n_heads"], cfg["mlp_hidden"]
    Dh = D // H
    bf16, f32 = jnp.bfloat16, jnp.float32

    # Embedding lookup (gather) -- plain-JAX glue outside the kernels.
    x = (p["tok_emb"][ids] + p["pos_emb"][jnp.arange(L)][None, :, :]).astype(f32)

    # Host-side weight repacking: expose the head dim on q/k/v/o weights so the
    # kernel needs no in-kernel reshapes/transposes; cast matmul weights to bf16.
    wq = p["wq"].reshape(N, D, H, Dh).transpose(0, 2, 1, 3).astype(bf16)  # (N,H,D,Dh)
    wk = p["wk"].reshape(N, D, H, Dh).transpose(0, 2, 1, 3).astype(bf16)
    wv = p["wv"].reshape(N, D, H, Dh).transpose(0, 2, 1, 3).astype(bf16)
    wo = p["wo"].reshape(N, H, Dh, D).astype(bf16)                        # (N,H,Dh,D)
    bq = p["bq"].reshape(N, H, 1, Dh).astype(f32)
    bk = p["bk"].reshape(N, H, 1, Dh).astype(f32)
    bv = p["bv"].reshape(N, H, 1, Dh).astype(f32)
    bo = p["bo"].reshape(N, 1, D).astype(f32)
    ln1_w = p["ln1_w"].reshape(N, 1, D).astype(f32)
    ln1_b = p["ln1_b"].reshape(N, 1, D).astype(f32)
    ln2_w = p["ln2_w"].reshape(N, 1, D).astype(f32)
    ln2_b = p["ln2_b"].reshape(N, 1, D).astype(f32)
    w1 = p["w1"].astype(bf16)
    b1 = p["b1"].reshape(N, 1, M).astype(f32)
    w2 = p["w2"].astype(bf16)
    b2 = p["b2"].reshape(N, 1, D).astype(f32)
    wp = p["wp"].astype(bf16)
    bp = p["bp"].astype(f32)
    lnf_w = p["lnf_w"].astype(f32)
    lnf_b = p["lnf_b"].astype(f32)

    def layer_block(shape):
        nd = len(shape)
        return pl.BlockSpec((1,) + shape, lambda b, l, _nd=nd: (l,) + (0,) * _nd)

    stack = functools.partial(decoder_stack_kernel, n_heads=H,
                              with_residuals=cfg["with_residuals"])

    # ---- decoder stack: grid over (batch, layer) ----------------------------
    acts = pl.pallas_call(
        stack,
        out_shape=jax.ShapeDtypeStruct((B, L, D), f32),
        grid=(B, N),
        in_specs=[
            pl.BlockSpec((1, L, D), lambda b, l: (b, 0, 0)),      # x (const over l)
            layer_block((1, D)), layer_block((1, D)),             # ln1 w/b
            layer_block((H, D, Dh)), layer_block((H, D, Dh)), layer_block((H, D, Dh)),
            layer_block((H, 1, Dh)), layer_block((H, 1, Dh)), layer_block((H, 1, Dh)),
            layer_block((H, Dh, D)), layer_block((1, D)),         # wo / bo
            layer_block((1, D)), layer_block((1, D)),             # ln2 w/b
            layer_block((D, M)), layer_block((1, M)),             # w1 / b1
            layer_block((M, D)), layer_block((1, D)),             # w2 / b2
        ],
        out_specs=pl.BlockSpec((1, L, D), lambda b, l: (b, 0, 0)),
        scratch_shapes=[pltpu.VMEM((L, D), f32)],
        compiler_params=pltpu.CompilerParams(
            dimension_semantics=("parallel", "arbitrary"),
            vmem_limit_bytes=32 * 1024 * 1024),
    )(x,
      ln1_w, ln1_b,
      wq, wk, wv, bq, bk, bv, wo, bo,
      ln2_w, ln2_b,
      w1, b1, w2, b2)

    # ---- final LayerNorm + vocab projection: grid over (batch, vocab tile) --
    TV = _vocab_tile(V)
    logits = pl.pallas_call(
        lm_head_kernel,
        out_shape=jax.ShapeDtypeStruct((B, L, V), f32),
        grid=(B, V // TV),
        in_specs=[
            pl.BlockSpec((1, L, D), lambda b, j: (b, 0, 0)),      # acts (const over j)
            pl.BlockSpec((D,), lambda b, j: (0,)),                # lnf_w
            pl.BlockSpec((D,), lambda b, j: (0,)),                # lnf_b
            pl.BlockSpec((D, TV), lambda b, j: (0, j)),           # wp column tile
            pl.BlockSpec((TV,), lambda b, j: (j,)),               # bp tile
        ],
        out_specs=pl.BlockSpec((1, L, TV), lambda b, j: (b, 0, j)),
        compiler_params=pltpu.CompilerParams(
            dimension_semantics=("parallel", "parallel"),
            vmem_limit_bytes=32 * 1024 * 1024),
    )(acts, lnf_w, lnf_b, wp, bp)
    return logits


def reference_forward(ids, p, cfg):
    """Pure-JAX f32 reference mirroring the TransformerLM math."""
    B, L = ids.shape
    D = cfg["embed"]
    H = cfg["n_heads"]
    Dh = D // H
    scale = 1.0 / (Dh ** 0.5)
    causal = jnp.tril(jnp.ones((L, L), dtype=bool))

    x = p["tok_emb"][ids] + p["pos_emb"][jnp.arange(L)][None]
    for l in range(cfg["n_layers"]):
        res = x
        h = _layer_norm(x, p["ln1_w"][l], p["ln1_b"][l])
        q = h @ p["wq"][l] + p["bq"][l]
        k = h @ p["wk"][l] + p["bk"][l]
        v = h @ p["wv"][l] + p["bv"][l]
        heads = []
        for hd in range(H):
            sl = slice(hd * Dh, (hd + 1) * Dh)
            s = jnp.einsum("bld,bmd->blm", q[..., sl], k[..., sl]) * scale
            s = jnp.where(causal[None], s, -1e30)
            pr = jax.nn.softmax(s, axis=-1)
            heads.append(jnp.einsum("blm,bmd->bld", pr, v[..., sl]))
        attn = jnp.concatenate(heads, axis=-1) @ p["wo"][l] + p["bo"][l]
        if cfg["with_residuals"]:
            x = attn + res
            res = x
        else:
            x = attn
        h = _layer_norm(x, p["ln2_w"][l], p["ln2_b"][l])
        h = jax.nn.gelu(h @ p["w1"][l] + p["b1"][l], approximate=True)
        h = h @ p["w2"][l] + p["b2"][l]
        x = (h + res) if cfg["with_residuals"] else h
    x = _layer_norm(x, p["lnf_w"], p["lnf_b"])
    return x @ p["wp"] + p["bp"]


def init_params(key, cfg):
    N, D, M = cfg["n_layers"], cfg["embed"], cfg["mlp_hidden"]
    V, C = cfg["vocab"], cfg["max_context"]

    def nrm(k, shape, scale=0.02):
        return scale * jax.random.normal(k, shape, dtype=jnp.float32)

    ks = jax.random.split(key, 9)
    return dict(
        tok_emb=nrm(ks[0], (V, D)),
        pos_emb=nrm(ks[1], (C, D)),
        ln1_w=jnp.ones((N, D), jnp.float32), ln1_b=jnp.zeros((N, D), jnp.float32),
        wq=nrm(ks[2], (N, D, D)), bq=jnp.zeros((N, D), jnp.float32),
        wk=nrm(ks[3], (N, D, D)), bk=jnp.zeros((N, D), jnp.float32),
        wv=nrm(ks[4], (N, D, D)), bv=jnp.zeros((N, D), jnp.float32),
        wo=nrm(ks[5], (N, D, D)), bo=jnp.zeros((N, D), jnp.float32),
        ln2_w=jnp.ones((N, D), jnp.float32), ln2_b=jnp.zeros((N, D), jnp.float32),
        w1=nrm(ks[6], (N, D, M)), b1=jnp.zeros((N, M), jnp.float32),
        w2=nrm(ks[7], (N, M, D)), b2=jnp.zeros((N, D), jnp.float32),
        lnf_w=jnp.ones((D,), jnp.float32), lnf_b=jnp.zeros((D,), jnp.float32),
        wp=nrm(ks[8], (D, V)), bp=jnp.zeros((V,), jnp.float32),
    )


if __name__ == "__main__":
    cfg = dict(
        n_layers=2,
        n_heads=4,
        embed=32,
        max_context=16,
        vocab=128,
        mlp_hidden=64,
        with_residuals=True,
    )
    B, L = 2, 8

    key = jax.random.PRNGKey(0)
    k_par, k_ids = jax.random.split(key)
    params = init_params(k_par, cfg)
    ids = jax.random.randint(k_ids, (B, L), 0, cfg["vocab"], dtype=jnp.int32)

    logits = transformer_lm_forward(ids, params, cfg)
    logits = jax.block_until_ready(logits)

    assert logits.shape == (B, L, cfg["vocab"])
    assert bool(jnp.all(jnp.isfinite(logits)))

    ref = reference_forward(ids, params, cfg)
    # Kernel uses bf16 matmul inputs (f32 accumulation) -> small tolerance.
    assert bool(jnp.allclose(logits, ref, rtol=2e-2, atol=2e-2))

    print("KERNEL_OK")
</pallas_src>

<mosaic_0001>
module attributes {stable_mosaic.version = 11 : i64} {
  func.func @decoder_stack_kernel(%arg0: i32, %arg1: i32, %arg2: memref<1x8x32xf32, #tpu.memory_space<vmem>>, %arg3: memref<1x1x32xf32, #tpu.memory_space<vmem>>, %arg4: memref<1x1x32xf32, #tpu.memory_space<vmem>>, %arg5: memref<1x4x32x8xbf16, #tpu.memory_space<vmem>>, %arg6: memref<1x4x32x8xbf16, #tpu.memory_space<vmem>>, %arg7: memref<1x4x32x8xbf16, #tpu.memory_space<vmem>>, %arg8: memref<1x4x1x8xf32, #tpu.memory_space<vmem>>, %arg9: memref<1x4x1x8xf32, #tpu.memory_space<vmem>>, %arg10: memref<1x4x1x8xf32, #tpu.memory_space<vmem>>, %arg11: memref<1x4x8x32xbf16, #tpu.memory_space<vmem>>, %arg12: memref<1x1x32xf32, #tpu.memory_space<vmem>>, %arg13: memref<1x1x32xf32, #tpu.memory_space<vmem>>, %arg14: memref<1x1x32xf32, #tpu.memory_space<vmem>>, %arg15: memref<1x32x64xbf16, #tpu.memory_space<vmem>>, %arg16: memref<1x1x64xf32, #tpu.memory_space<vmem>>, %arg17: memref<1x64x32xbf16, #tpu.memory_space<vmem>>, %arg18: memref<1x1x32xf32, #tpu.memory_space<vmem>>, %arg19: memref<1x8x32xf32, #tpu.memory_space<vmem>>, %arg20: memref<8x32xf32, #tpu.memory_space<vmem>>) attributes {dimension_semantics = [#tpu.dimension_semantics<parallel>, #tpu.dimension_semantics<arbitrary>], iteration_bounds = array<i64: 2, 2>, scalar_prefetch = 0 : i64, scratch_operands = 1 : i64, tpu.core_type = #tpu.core_type<tc>, window_params = [{transform_indices = @transform_0, window_bounds = array<i64: 1, 8, 32>}, {transform_indices = @transform_1, window_bounds = array<i64: 1, 1, 32>}, {transform_indices = @transform_2, window_bounds = array<i64: 1, 1, 32>}, {transform_indices = @transform_3, window_bounds = array<i64: 1, 4, 32, 8>}, {transform_indices = @transform_4, window_bounds = array<i64: 1, 4, 32, 8>}, {transform_indices = @transform_5, window_bounds = array<i64: 1, 4, 32, 8>}, {transform_indices = @transform_6, window_bounds = array<i64: 1, 4, 1, 8>}, {transform_indices = @transform_7, window_bounds = array<i64: 1, 4, 1, 8>}, {transform_indices = @transform_8, window_bounds = array<i64: 1, 4, 1, 8>}, {transform_indices = @transform_9, window_bounds = array<i64: 1, 4, 8, 32>}, {transform_indices = @transform_10, window_bounds = array<i64: 1, 1, 32>}, {transform_indices = @transform_11, window_bounds = array<i64: 1, 1, 32>}, {transform_indices = @transform_12, window_bounds = array<i64: 1, 1, 32>}, {transform_indices = @transform_13, window_bounds = array<i64: 1, 32, 64>}, {transform_indices = @transform_14, window_bounds = array<i64: 1, 1, 64>}, {transform_indices = @transform_15, window_bounds = array<i64: 1, 64, 32>}, {transform_indices = @transform_16, window_bounds = array<i64: 1, 1, 32>}, {transform_indices = @transform_17, window_bounds = array<i64: 1, 8, 32>}]} {
    %c0_i32 = arith.constant 0 : i32
    %0 = arith.cmpi eq, %arg1, %c0_i32 : i32
    %1 = arith.extui %0 : i1 to i32
    %c0_i32_0 = arith.constant 0 : i32
    %2 = arith.cmpi ne, %1, %c0_i32_0 : i32
    scf.if %2 {
      %c0_86 = arith.constant 0 : index
      %c0_87 = arith.constant 0 : index
      %c0_88 = arith.constant 0 : index
      %157 = vector.load %arg2[%c0_86, %c0_87, %c0_88] : memref<1x8x32xf32, #tpu.memory_space<vmem>>, vector<1x8x32xf32>
      %158 = vector.shape_cast %157 : vector<1x8x32xf32> to vector<8x32xf32>
      %c0_89 = arith.constant 0 : index
      %c0_90 = arith.constant 0 : index
      %159 = vector.load %arg20[%c0_89, %c0_90] : memref<8x32xf32, #tpu.memory_space<vmem>>, vector<8x32xf32>
      tpu.vector_store %arg20[%c0_89, %c0_90], %158 {strides = array<i32>} : memref<8x32xf32, #tpu.memory_space<vmem>>, vector<8x32xf32>,
    } else {
    }
    %c0 = arith.constant 0 : index
    %c0_1 = arith.constant 0 : index
    %3 = vector.load %arg20[%c0, %c0_1] : memref<8x32xf32, #tpu.memory_space<vmem>>, vector<8x32xf32>
    %c0_2 = arith.constant 0 : index
    %c0_3 = arith.constant 0 : index
    %c0_4 = arith.constant 0 : index
    %4 = vector.load %arg3[%c0_2, %c0_3, %c0_4] : memref<1x1x32xf32, #tpu.memory_space<vmem>>, vector<1x1x32xf32>
    %5 = vector.shape_cast %4 : vector<1x1x32xf32> to vector<32xf32>
    %c0_5 = arith.constant 0 : index
    %c0_6 = arith.constant 0 : index
    %c0_7 = arith.constant 0 : index
    %6 = vector.load %arg4[%c0_5, %c0_6, %c0_7] : memref<1x1x32xf32, #tpu.memory_space<vmem>>, vector<1x1x32xf32>
    %7 = vector.shape_cast %6 : vector<1x1x32xf32> to vector<32xf32>
    %cst = arith.constant dense<0.000000e+00> : vector<8xf32>
    %8 = vector.multi_reduction <add>, %3, %cst [1] : vector<8x32xf32> to vector<8xf32>
    %9 = vector.shape_cast %8 : vector<8xf32> to vector<8x1xf32>
    %cst_8 = arith.constant 3.200000e+01 : f32
    %10 = vector.broadcast %cst_8 : f32 to vector<8x1xf32>
    %11 = arith.divf %9, %10 : vector<8x1xf32>
    %12 = vector.broadcast %11 : vector<8x1xf32> to vector<8x32xf32>
    %13 = arith.subf %3, %12 : vector<8x32xf32>
    %14 = arith.mulf %13, %13 : vector<8x32xf32>
    %cst_9 = arith.constant dense<0.000000e+00> : vector<8xf32>
    %15 = vector.multi_reduction <add>, %14, %cst_9 [1] : vector<8x32xf32> to vector<8xf32>
    %16 = vector.shape_cast %15 : vector<8xf32> to vector<8x1xf32>
    %cst_10 = arith.constant 3.200000e+01 : f32
    %17 = vector.broadcast %cst_10 : f32 to vector<8x1xf32>
    %18 = arith.divf %16, %17 : vector<8x1xf32>
    %19 = vector.broadcast %11 : vector<8x1xf32> to vector<8x32xf32>
    %20 = arith.subf %3, %19 : vector<8x32xf32>
    %cst_11 = arith.constant 9.99999974E-6 : f32
    %21 = vector.broadcast %cst_11 : f32 to vector<8x1xf32>
    %22 = arith.addf %18, %21 : vector<8x1xf32>
    %23 = math.rsqrt %22 : vector<8x1xf32>
    %24 = vector.broadcast %23 : vector<8x1xf32> to vector<8x32xf32>
    %25 = arith.mulf %20, %24 : vector<8x32xf32>
    %26 = vector.shape_cast %5 : vector<32xf32> to vector<1x32xf32>
    %27 = vector.broadcast %26 : vector<1x32xf32> to vector<8x32xf32>
    %28 = arith.mulf %25, %27 : vector<8x32xf32>
    %29 = vector.shape_cast %7 : vector<32xf32> to vector<1x32xf32>
    %30 = vector.broadcast %29 : vector<1x32xf32> to vector<8x32xf32>
    %31 = arith.addf %28, %30 : vector<8x32xf32>
    %32 = arith.truncf %31 : vector<8x32xf32> to vector<8x32xbf16>
    %33 = vector.shape_cast %32 : vector<8x32xbf16> to vector<1x8x32xbf16>
    %34 = vector.broadcast %33 : vector<1x8x32xbf16> to vector<4x8x32xbf16>
    %c0_12 = arith.constant 0 : index
    %c0_13 = arith.constant 0 : index
    %c0_14 = arith.constant 0 : index
    %c0_15 = arith.constant 0 : index
    %35 = vector.load %arg5[%c0_12, %c0_13, %c0_14, %c0_15] : memref<1x4x32x8xbf16, #tpu.memory_space<vmem>>, vector<1x4x32x8xbf16>
    %36 = vector.shape_cast %35 : vector<1x4x32x8xbf16> to vector<4x32x8xbf16>
    "tpu.trace_start"() <{level = 10 : i32, message = "hld,hdk->hlk"}> : () -> ()
    %cst_16 = arith.constant dense<0.000000e+00> : vector<4x8x8xf32>
    %37 = tpu.matmul %34, %36, %cst_16 {dimension_numbers = #tpu.dot_dimension_numbers<[2], [1], [1], [2], [0, 0, 0, 1, 1, 2], [0], [0]>} : vector<4x8x32xbf16>, vector<4x32x8xbf16>, vector<4x8x8xf32> -> vector<4x8x8xf32>
    "tpu.trace_stop"() : () -> ()
    %c0_17 = arith.constant 0 : index
    %c0_18 = arith.constant 0 : index
    %c0_19 = arith.constant 0 : index
    %c0_20 = arith.constant 0 : index
    %38 = vector.load %arg8[%c0_17, %c0_18, %c0_19, %c0_20] : memref<1x4x1x8xf32, #tpu.memory_space<vmem>>, vector<1x4x1x8xf32>
    %39 = vector.shape_cast %38 : vector<1x4x1x8xf32> to vector<4x1x8xf32>
    %40 = vector.broadcast %39 : vector<4x1x8xf32> to vector<4x8x8xf32>
    %41 = arith.addf %37, %40 : vector<4x8x8xf32>
    %c0_21 = arith.constant 0 : index
    %c0_22 = arith.constant 0 : index
    %c0_23 = arith.constant 0 : index
    %c0_24 = arith.constant 0 : index
    %42 = vector.load %arg6[%c0_21, %c0_22, %c0_23, %c0_24] : memref<1x4x32x8xbf16, #tpu.memory_space<vmem>>, vector<1x4x32x8xbf16>
    %43 = vector.shape_cast %42 : vector<1x4x32x8xbf16> to vector<4x32x8xbf16>
    "tpu.trace_start"() <{level = 10 : i32, message = "hld,hdk->hlk"}> : () -> ()
    %cst_25 = arith.constant dense<0.000000e+00> : vector<4x8x8xf32>
    %44 = tpu.matmul %34, %43, %cst_25 {dimension_numbers = #tpu.dot_dimension_numbers<[2], [1], [1], [2], [0, 0, 0, 1, 1, 2], [0], [0]>} : vector<4x8x32xbf16>, vector<4x32x8xbf16>, vector<4x8x8xf32> -> vector<4x8x8xf32>
    "tpu.trace_stop"() : () -> ()
    %c0_26 = arith.constant 0 : index
    %c0_27 = arith.constant 0 : index
    %c0_28 = arith.constant 0 : index
    %c0_29 = arith.constant 0 : index
    %45 = vector.load %arg9[%c0_26, %c0_27, %c0_28, %c0_29] : memref<1x4x1x8xf32, #tpu.memory_space<vmem>>, vector<1x4x1x8xf32>
    %46 = vector.shape_cast %45 : vector<1x4x1x8xf32> to vector<4x1x8xf32>
    %47 = vector.broadcast %46 : vector<4x1x8xf32> to vector<4x8x8xf32>
    %48 = arith.addf %44, %47 : vector<4x8x8xf32>
    %c0_30 = arith.constant 0 : index
    %c0_31 = arith.constant 0 : index
    %c0_32 = arith.constant 0 : index
    %c0_33 = arith.constant 0 : index
    %49 = vector.load %arg7[%c0_30, %c0_31, %c0_32, %c0_33] : memref<1x4x32x8xbf16, #tpu.memory_space<vmem>>, vector<1x4x32x8xbf16>
    %50 = vector.shape_cast %49 : vector<1x4x32x8xbf16> to vector<4x32x8xbf16>
    "tpu.trace_start"() <{level = 10 : i32, message = "hld,hdk->hlk"}> : () -> ()
    %cst_34 = arith.constant dense<0.000000e+00> : vector<4x8x8xf32>
    %51 = tpu.matmul %34, %50, %cst_34 {dimension_numbers = #tpu.dot_dimension_numbers<[2], [1], [1], [2], [0, 0, 0, 1, 1, 2], [0], [0]>} : vector<4x8x32xbf16>, vector<4x32x8xbf16>, vector<4x8x8xf32> -> vector<4x8x8xf32>
    "tpu.trace_stop"() : () -> ()
    %c0_35 = arith.constant 0 : index
    %c0_36 = arith.constant 0 : index
    %c0_37 = arith.constant 0 : index
    %c0_38 = arith.constant 0 : index
    %52 = vector.load %arg10[%c0_35, %c0_36, %c0_37, %c0_38] : memref<1x4x1x8xf32, #tpu.memory_space<vmem>>, vector<1x4x1x8xf32>
    %53 = vector.shape_cast %52 : vector<1x4x1x8xf32> to vector<4x1x8xf32>
    %54 = vector.broadcast %53 : vector<4x1x8xf32> to vector<4x8x8xf32>
    %55 = arith.addf %51, %54 : vector<4x8x8xf32>
    %56 = tpu.iota {dimensions = array<i32: 0>} : vector<8x8xi32>
    %57 = tpu.iota {dimensions = array<i32: 1>} : vector<8x8xi32>
    %58 = arith.cmpi sle, %57, %56 : vector<8x8xi32>
    %59 = vector.shape_cast %58 : vector<8x8xi1> to vector<1x8x8xi1>
    %60 = arith.truncf %41 : vector<4x8x8xf32> to vector<4x8x8xbf16>
    %61 = arith.truncf %48 : vector<4x8x8xf32> to vector<4x8x8xbf16>
    "tpu.trace_start"() <{level = 10 : i32, message = "hqd,hkd->hqk"}> : () -> ()
    %cst_39 = arith.constant dense<0.000000e+00> : vector<4x8x8xf32>
    %62 = tpu.matmul %60, %61, %cst_39 {dimension_numbers = #tpu.dot_dimension_numbers<[2], [2], [1], [1], [0, 0, 0, 1, 1, 1], [0], [0]>} : vector<4x8x8xbf16>, vector<4x8x8xbf16>, vector<4x8x8xf32> -> vector<4x8x8xf32>
    "tpu.trace_stop"() : () -> ()
    %cst_40 = arith.constant 0.353553385 : f32
    %63 = vector.broadcast %cst_40 : f32 to vector<4x8x8xf32>
    %64 = arith.mulf %62, %63 : vector<4x8x8xf32>
    %cst_41 = arith.constant -1.000000e+30 : f32
    %65 = vector.shape_cast %59 : vector<1x8x8xi1> to vector<1x8x8xi1>
    %66 = vector.broadcast %65 : vector<1x8x8xi1> to vector<4x8x8xi1>
    %67 = vector.broadcast %cst_41 : f32 to vector<4x8x8xf32>
    %68 = arith.select %66, %64, %67 : vector<4x8x8xi1>, vector<4x8x8xf32>
    %cst_42 = arith.constant dense<0xFF800000> : vector<4x8xf32>
    %69 = vector.multi_reduction <maximumf>, %68, %cst_42 [2] : vector<4x8x8xf32> to vector<4x8xf32>
    %70 = vector.shape_cast %69 : vector<4x8xf32> to vector<4x8x1xf32>
    %71 = vector.broadcast %70 : vector<4x8x1xf32> to vector<4x8x8xf32>
    %72 = arith.subf %68, %71 : vector<4x8x8xf32>
    %73 = math.exp %72 : vector<4x8x8xf32>
    %cst_43 = arith.constant dense<0.000000e+00> : vector<4x8xf32>
    %74 = vector.multi_reduction <add>, %73, %cst_43 [2] : vector<4x8x8xf32> to vector<4x8xf32>
    %75 = vector.shape_cast %74 : vector<4x8xf32> to vector<4x8x1xf32>
    %76 = tpu.reciprocal %75 {approx = true} : vector<4x8x1xf32> -> vector<4x8x1xf32>
    %77 = vector.broadcast %76 : vector<4x8x1xf32> to vector<4x8x8xf32>
    %78 = arith.mulf %73, %77 : vector<4x8x8xf32>
    %79 = arith.truncf %78 : vector<4x8x8xf32> to vector<4x8x8xbf16>
    %80 = arith.truncf %55 : vector<4x8x8xf32> to vector<4x8x8xbf16>
    "tpu.trace_start"() <{level = 10 : i32, message = "hqk,hkd->hqd"}> : () -> ()
    %cst_44 = arith.constant dense<0.000000e+00> : vector<4x8x8xf32>
    %81 = tpu.matmul %79, %80, %cst_44 {dimension_numbers = #tpu.dot_dimension_numbers<[2], [1], [1], [2], [0, 0, 0, 1, 1, 2], [0], [0]>} : vector<4x8x8xbf16>, vector<4x8x8xbf16>, vector<4x8x8xf32> -> vector<4x8x8xf32>
    "tpu.trace_stop"() : () -> ()
    %82 = arith.truncf %81 : vector<4x8x8xf32> to vector<4x8x8xbf16>
    %c0_45 = arith.constant 0 : index
    %c0_46 = arith.constant 0 : index
    %c0_47 = arith.constant 0 : index
    %c0_48 = arith.constant 0 : index
    %83 = vector.load %arg11[%c0_45, %c0_46, %c0_47, %c0_48] : memref<1x4x8x32xbf16, #tpu.memory_space<vmem>>, vector<1x4x8x32xbf16>
    %84 = vector.shape_cast %83 : vector<1x4x8x32xbf16> to vector<4x8x32xbf16>
    "tpu.trace_start"() <{level = 10 : i32, message = "hld,hdk->hlk"}> : () -> ()
    %cst_49 = arith.constant dense<0.000000e+00> : vector<4x8x32xf32>
    %85 = tpu.matmul %82, %84, %cst_49 {dimension_numbers = #tpu.dot_dimension_numbers<[2], [1], [1], [2], [0, 0, 0, 1, 1, 2], [0], [0]>} : vector<4x8x8xbf16>, vector<4x8x32xbf16>, vector<4x8x32xf32> -> vector<4x8x32xf32>
    "tpu.trace_stop"() : () -> ()
    %cst_50 = arith.constant dense<0.000000e+00> : vector<8x32xf32>
    %86 = vector.multi_reduction <add>, %85, %cst_50 [0] : vector<4x8x32xf32> to vector<8x32xf32>
    %c0_51 = arith.constant 0 : index
    %c0_52 = arith.constant 0 : index
    %c0_53 = arith.constant 0 : index
    %87 = vector.load %arg12[%c0_51, %c0_52, %c0_53] : memref<1x1x32xf32, #tpu.memory_space<vmem>>, vector<1x1x32xf32>
    %88 = vector.shape_cast %87 : vector<1x1x32xf32> to vector<32xf32>
    %89 = vector.shape_cast %88 : vector<32xf32> to vector<1x32xf32>
    %90 = vector.broadcast %89 : vector<1x32xf32> to vector<8x32xf32>
    %91 = arith.addf %86, %90 : vector<8x32xf32>
    %92 = arith.addf %3, %91 : vector<8x32xf32>
    %c0_54 = arith.constant 0 : index
    %c0_55 = arith.constant 0 : index
    %c0_56 = arith.constant 0 : index
    %93 = vector.load %arg13[%c0_54, %c0_55, %c0_56] : memref<1x1x32xf32, #tpu.memory_space<vmem>>, vector<1x1x32xf32>
    %94 = vector.shape_cast %93 : vector<1x1x32xf32> to vector<32xf32>
    %c0_57 = arith.constant 0 : index
    %c0_58 = arith.constant 0 : index
    %c0_59 = arith.constant 0 : index
    %95 = vector.load %arg14[%c0_57, %c0_58, %c0_59] : memref<1x1x32xf32, #tpu.memory_space<vmem>>, vector<1x1x32xf32>
    %96 = vector.shape_cast %95 : vector<1x1x32xf32> to vector<32xf32>
    %cst_60 = arith.constant dense<0.000000e+00> : vector<8xf32>
    %97 = vector.multi_reduction <add>, %92, %cst_60 [1] : vector<8x32xf32> to vector<8xf32>
    %98 = vector.shape_cast %97 : vector<8xf32> to vector<8x1xf32>
    %cst_61 = arith.constant 3.200000e+01 : f32
    %99 = vector.broadcast %cst_61 : f32 to vector<8x1xf32>
    %100 = arith.divf %98, %99 : vector<8x1xf32>
    %101 = vector.broadcast %100 : vector<8x1xf32> to vector<8x32xf32>
    %102 = arith.subf %92, %101 : vector<8x32xf32>
    %103 = arith.mulf %102, %102 : vector<8x32xf32>
    %cst_62 = arith.constant dense<0.000000e+00> : vector<8xf32>
    %104 = vector.multi_reduction <add>, %103, %cst_62 [1] : vector<8x32xf32> to vector<8xf32>
    %105 = vector.shape_cast %104 : vector<8xf32> to vector<8x1xf32>
    %cst_63 = arith.constant 3.200000e+01 : f32
    %106 = vector.broadcast %cst_63 : f32 to vector<8x1xf32>
    %107 = arith.divf %105, %106 : vector<8x1xf32>
    %108 = vector.broadcast %100 : vector<8x1xf32> to vector<8x32xf32>
    %109 = arith.subf %92, %108 : vector<8x32xf32>
    %cst_64 = arith.constant 9.99999974E-6 : f32
    %110 = vector.broadcast %cst_64 : f32 to vector<8x1xf32>
    %111 = arith.addf %107, %110 : vector<8x1xf32>
    %112 = math.rsqrt %111 : vector<8x1xf32>
    %113 = vector.broadcast %112 : vector<8x1xf32> to vector<8x32xf32>
    %114 = arith.mulf %109, %113 : vector<8x32xf32>
    %115 = vector.shape_cast %94 : vector<32xf32> to vector<1x32xf32>
    %116 = vector.broadcast %115 : vector<1x32xf32> to vector<8x32xf32>
    %117 = arith.mulf %114, %116 : vector<8x32xf32>
    %118 = vector.shape_cast %96 : vector<32xf32> to vector<1x32xf32>
    %119 = vector.broadcast %118 : vector<1x32xf32> to vector<8x32xf32>
    %120 = arith.addf %117, %119 : vector<8x32xf32>
    %121 = arith.truncf %120 : vector<8x32xf32> to vector<8x32xbf16>
    %c0_65 = arith.constant 0 : index
    %c0_66 = arith.constant 0 : index
    %c0_67 = arith.constant 0 : index
    %122 = vector.load %arg15[%c0_65, %c0_66, %c0_67] : memref<1x32x64xbf16, #tpu.memory_space<vmem>>, vector<1x32x64xbf16>
    %123 = vector.shape_cast %122 : vector<1x32x64xbf16> to vector<32x64xbf16>
    %cst_68 = arith.constant dense<0.000000e+00> : vector<8x64xf32>
    %124 = tpu.matmul %121, %123, %cst_68 {dimension_numbers = #tpu.dot_dimension_numbers<[1], [0], [0], [1], [0, 0, 1, 1], [], []>} : vector<8x32xbf16>, vector<32x64xbf16>, vector<8x64xf32> -> vector<8x64xf32>
    %c0_69 = arith.constant 0 : index
    %c0_70 = arith.constant 0 : index
    %c0_71 = arith.constant 0 : index
    %125 = vector.load %arg16[%c0_69, %c0_70, %c0_71] : memref<1x1x64xf32, #tpu.memory_space<vmem>>, vector<1x1x64xf32>
    %126 = vector.shape_cast %125 : vector<1x1x64xf32> to vector<64xf32>
    %127 = vector.shape_cast %126 : vector<64xf32> to vector<1x64xf32>
    %128 = vector.broadcast %127 : vector<1x64xf32> to vector<8x64xf32>
    %129 = arith.addf %124, %128 : vector<8x64xf32>
    %130 = arith.mulf %129, %129 : vector<8x64xf32>
    %131 = arith.mulf %129, %130 : vector<8x64xf32>
    %cst_72 = arith.constant 4.471500e-02 : f32
    %132 = vector.broadcast %cst_72 : f32 to vector<8x64xf32>
    %133 = arith.mulf %132, %131 : vector<8x64xf32>
    %134 = arith.addf %129, %133 : vector<8x64xf32>
    %cst_73 = arith.constant 0.797884583 : f32
    %135 = vector.broadcast %cst_73 : f32 to vector<8x64xf32>
    %136 = arith.mulf %135, %134 : vector<8x64xf32>
    %137 = math.tanh %136 : vector<8x64xf32>
    %cst_74 = arith.constant 1.000000e+00 : f32
    %138 = vector.broadcast %cst_74 : f32 to vector<8x64xf32>
    %139 = arith.addf %138, %137 : vector<8x64xf32>
    %cst_75 = arith.constant 5.000000e-01 : f32
    %140 = vector.broadcast %cst_75 : f32 to vector<8x64xf32>
    %141 = arith.mulf %140, %139 : vector<8x64xf32>
    %142 = arith.mulf %129, %141 : vector<8x64xf32>
    %143 = arith.truncf %142 : vector<8x64xf32> to vector<8x64xbf16>
    %c0_76 = arith.constant 0 : index
    %c0_77 = arith.constant 0 : index
    %c0_78 = arith.constant 0 : index
    %144 = vector.load %arg17[%c0_76, %c0_77, %c0_78] : memref<1x64x32xbf16, #tpu.memory_space<vmem>>, vector<1x64x32xbf16>
    %145 = vector.shape_cast %144 : vector<1x64x32xbf16> to vector<64x32xbf16>
    %cst_79 = arith.constant dense<0.000000e+00> : vector<8x32xf32>
    %146 = tpu.matmul %143, %145, %cst_79 {dimension_numbers = #tpu.dot_dimension_numbers<[1], [0], [0], [1], [0, 0, 1, 1], [], []>} : vector<8x64xbf16>, vector<64x32xbf16>, vector<8x32xf32> -> vector<8x32xf32>
    %c0_80 = arith.constant 0 : index
    %c0_81 = arith.constant 0 : index
    %c0_82 = arith.constant 0 : index
    %147 = vector.load %arg18[%c0_80, %c0_81, %c0_82] : memref<1x1x32xf32, #tpu.memory_space<vmem>>, vector<1x1x32xf32>
    %148 = vector.shape_cast %147 : vector<1x1x32xf32> to vector<32xf32>
    %149 = vector.shape_cast %148 : vector<32xf32> to vector<1x32xf32>
    %150 = vector.broadcast %149 : vector<1x32xf32> to vector<8x32xf32>
    %151 = arith.addf %146, %150 : vector<8x32xf32>
    %152 = arith.addf %92, %151 : vector<8x32xf32>
    %c0_83 = arith.constant 0 : index
    %c0_84 = arith.constant 0 : index
    %153 = vector.load %arg20[%c0_83, %c0_84] : memref<8x32xf32, #tpu.memory_space<vmem>>, vector<8x32xf32>
    tpu.vector_store %arg20[%c0_83, %c0_84], %152 {strides = array<i32>} : memref<8x32xf32, #tpu.memory_space<vmem>>, vector<8x32xf32>,
    %c1_i32 = arith.constant 1 : i32
    %154 = arith.cmpi eq, %arg1, %c1_i32 : i32
    %155 = arith.extui %154 : i1 to i32
    %c0_i32_85 = arith.constant 0 : i32
    %156 = arith.cmpi ne, %155, %c0_i32_85 : i32
    scf.if %156 {
      %c0_86 = arith.constant 0 : index
      %c0_87 = arith.constant 0 : index
      %c0_88 = arith.constant 0 : index
      %157 = vector.load %arg19[%c0_86, %c0_87, %c0_88] : memref<1x8x32xf32, #tpu.memory_space<vmem>>, vector<1x8x32xf32>
      %158 = vector.shape_cast %157 : vector<1x8x32xf32> to vector<8x32xf32>
      %159 = vector.shape_cast %152 : vector<8x32xf32> to vector<1x8x32xf32>
      tpu.vector_store %arg19[%c0_86, %c0_87, %c0_88], %159 {strides = array<i32>} : memref<1x8x32xf32, #tpu.memory_space<vmem>>, vector<1x8x32xf32>,
    } else {
    }
    return
  }
  func.func @transform_0(%arg0: i32, %arg1: i32) -> (i32, i32, i32) {
    %c0_i32 = arith.constant 0 : i32
    %c0_i32_0 = arith.constant 0 : i32
    %c0_i32_1 = arith.constant 0 : i32
    return %arg0, %c0_i32, %c0_i32_0 : i32, i32, i32
  }
  func.func @transform_1(%arg0: i32, %arg1: i32) -> (i32, i32, i32) {
    %c0_i32 = arith.constant 0 : i32
    %c0_i32_0 = arith.constant 0 : i32
    %c0_i32_1 = arith.constant 0 : i32
    return %arg1, %c0_i32, %c0_i32_0 : i32, i32, i32
  }
  func.func @transform_2(%arg0: i32, %arg1: i32) -> (i32, i32, i32) {
    %c0_i32 = arith.constant 0 : i32
    %c0_i32_0 = arith.constant 0 : i32
    %c0_i32_1 = arith.constant 0 : i32
    return %arg1, %c0_i32, %c0_i32_0 : i32, i32, i32
  }
  func.func @transform_3(%arg0: i32, %arg1: i32) -> (i32, i32, i32, i32) {
    %c0_i32 = arith.constant 0 : i32
    %c0_i32_0 = arith.constant 0 : i32
    %c0_i32_1 = arith.constant 0 : i32
    %c0_i32_2 = arith.constant 0 : i32
    return %arg1, %c0_i32, %c0_i32_0, %c0_i32_1 : i32, i32, i32, i32
  }
  func.func @transform_4(%arg0: i32, %arg1: i32) -> (i32, i32, i32, i32) {
    %c0_i32 = arith.constant 0 : i32
    %c0_i32_0 = arith.constant 0 : i32
    %c0_i32_1 = arith.constant 0 : i32
    %c0_i32_2 = arith.constant 0 : i32
    return %arg1, %c0_i32, %c0_i32_0, %c0_i32_1 : i32, i32, i32, i32
  }
  func.func @transform_5(%arg0: i32, %arg1: i32) -> (i32, i32, i32, i32) {
    %c0_i32 = arith.constant 0 : i32
    %c0_i32_0 = arith.constant 0 : i32
    %c0_i32_1 = arith.constant 0 : i32
    %c0_i32_2 = arith.constant 0 : i32
    return %arg1, %c0_i32, %c0_i32_0, %c0_i32_1 : i32, i32, i32, i32
  }
  func.func @transform_6(%arg0: i32, %arg1: i32) -> (i32, i32, i32, i32) {
    %c0_i32 = arith.constant 0 : i32
    %c0_i32_0 = arith.constant 0 : i32
    %c0_i32_1 = arith.constant 0 : i32
    %c0_i32_2 = arith.constant 0 : i32
    return %arg1, %c0_i32, %c0_i32_0, %c0_i32_1 : i32, i32, i32, i32
  }
  func.func @transform_7(%arg0: i32, %arg1: i32) -> (i32, i32, i32, i32) {
    %c0_i32 = arith.constant 0 : i32
    %c0_i32_0 = arith.constant 0 : i32
    %c0_i32_1 = arith.constant 0 : i32
    %c0_i32_2 = arith.constant 0 : i32
    return %arg1, %c0_i32, %c0_i32_0, %c0_i32_1 : i32, i32, i32, i32
  }
  func.func @transform_8(%arg0: i32, %arg1: i32) -> (i32, i32, i32, i32) {
    %c0_i32 = arith.constant 0 : i32
    %c0_i32_0 = arith.constant 0 : i32
    %c0_i32_1 = arith.constant 0 : i32
    %c0_i32_2 = arith.constant 0 : i32
    return %arg1, %c0_i32, %c0_i32_0, %c0_i32_1 : i32, i32, i32, i32
  }
  func.func @transform_9(%arg0: i32, %arg1: i32) -> (i32, i32, i32, i32) {
    %c0_i32 = arith.constant 0 : i32
    %c0_i32_0 = arith.constant 0 : i32
    %c0_i32_1 = arith.constant 0 : i32
    %c0_i32_2 = arith.constant 0 : i32
    return %arg1, %c0_i32, %c0_i32_0, %c0_i32_1 : i32, i32, i32, i32
  }
  func.func @transform_10(%arg0: i32, %arg1: i32) -> (i32, i32, i32) {
    %c0_i32 = arith.constant 0 : i32
    %c0_i32_0 = arith.constant 0 : i32
    %c0_i32_1 = arith.constant 0 : i32
    return %arg1, %c0_i32, %c0_i32_0 : i32, i32, i32
  }
  func.func @transform_11(%arg0: i32, %arg1: i32) -> (i32, i32, i32) {
    %c0_i32 = arith.constant 0 : i32
    %c0_i32_0 = arith.constant 0 : i32
    %c0_i32_1 = arith.constant 0 : i32
    return %arg1, %c0_i32, %c0_i32_0 : i32, i32, i32
  }
  func.func @transform_12(%arg0: i32, %arg1: i32) -> (i32, i32, i32) {
    %c0_i32 = arith.constant 0 : i32
    %c0_i32_0 = arith.constant 0 : i32
    %c0_i32_1 = arith.constant 0 : i32
    return %arg1, %c0_i32, %c0_i32_0 : i32, i32, i32
  }
  func.func @transform_13(%arg0: i32, %arg1: i32) -> (i32, i32, i32) {
    %c0_i32 = arith.constant 0 : i32
    %c0_i32_0 = arith.constant 0 : i32
    %c0_i32_1 = arith.constant 0 : i32
    return %arg1, %c0_i32, %c0_i32_0 : i32, i32, i32
  }
  func.func @transform_14(%arg0: i32, %arg1: i32) -> (i32, i32, i32) {
    %c0_i32 = arith.constant 0 : i32
    %c0_i32_0 = arith.constant 0 : i32
    %c0_i32_1 = arith.constant 0 : i32
    return %arg1, %c0_i32, %c0_i32_0 : i32, i32, i32
  }
  func.func @transform_15(%arg0: i32, %arg1: i32) -> (i32, i32, i32) {
    %c0_i32 = arith.constant 0 : i32
    %c0_i32_0 = arith.constant 0 : i32
    %c0_i32_1 = arith.constant 0 : i32
    return %arg1, %c0_i32, %c0_i32_0 : i32, i32, i32
  }
  func.func @transform_16(%arg0: i32, %arg1: i32) -> (i32, i32, i32) {
    %c0_i32 = arith.constant 0 : i32
    %c0_i32_0 = arith.constant 0 : i32
    %c0_i32_1 = arith.constant 0 : i32
    return %arg1, %c0_i32, %c0_i32_0 : i32, i32, i32
  }
  func.func @transform_17(%arg0: i32, %arg1: i32) -> (i32, i32, i32) {
    %c0_i32 = arith.constant 0 : i32
    %c0_i32_0 = arith.constant 0 : i32
    %c0_i32_1 = arith.constant 0 : i32
    return %arg0, %c0_i32, %c0_i32_0 : i32, i32, i32
  }
}

</mosaic_0001>

<llo_original>
// kernel: tpu_custom_call.1
$region0: #{tpu_custom_call.1}
  #allocation0 [shape = 'u32[]', space=smem, size = 0x4, offset = 0x4, fixed_abs, tag = 'smem constant byte address 0x4 - core index']
  #allocation1 [shape = 'u32[144,128]{1,0:T(1,128)}', space=vmem, size = 0x12000, scoped, tag = 'internal scratch']
  #allocation2 [shape = 'f32[8,32]{1,0:T(8,128)}', space=vmem, size = 0x1000, scoped, tag = 'scratch operand']
  %s0 = inlined_call_operand.vmem [shape: f32[2,8,32], index: 0, kind: input, shape index: {}]
  %s1 = inlined_call_operand.vmem [shape: f32[2,1,32], index: 1, kind: input, shape index: {}]
  %s2 = inlined_call_operand.vmem [shape: f32[2,1,32], index: 2, kind: input, shape index: {}]
  %s3 = inlined_call_operand.vmem [shape: bf16[2,4,32,8], index: 3, kind: input, shape index: {}]
  %s4 = inlined_call_operand.vmem [shape: bf16[2,4,32,8], index: 4, kind: input, shape index: {}]
  %s5 = inlined_call_operand.vmem [shape: bf16[2,4,32,8], index: 5, kind: input, shape index: {}]
  %s6 = inlined_call_operand.vmem [shape: f32[2,4,1,8], index: 6, kind: input, shape index: {}]
  %s7 = inlined_call_operand.vmem [shape: f32[2,4,1,8], index: 7, kind: input, shape index: {}]
  %s8 = inlined_call_operand.vmem [shape: f32[2,4,1,8], index: 8, kind: input, shape index: {}]
  %s9 = inlined_call_operand.vmem [shape: bf16[2,4,8,32], index: 9, kind: input, shape index: {}]
  %s10 = inlined_call_operand.vmem [shape: f32[2,1,32], index: 10, kind: input, shape index: {}]
  %s11 = inlined_call_operand.vmem [shape: f32[2,1,32], index: 11, kind: input, shape index: {}]
  %s12 = inlined_call_operand.vmem [shape: f32[2,1,32], index: 12, kind: input, shape index: {}]
  %s13 = inlined_call_operand.vmem [shape: bf16[2,32,64], index: 13, kind: input, shape index: {}]
  %s14 = inlined_call_operand.vmem [shape: f32[2,1,64], index: 14, kind: input, shape index: {}]
  %s15 = inlined_call_operand.vmem [shape: bf16[2,64,32], index: 15, kind: input, shape index: {}]
  %s16 = inlined_call_operand.vmem [shape: f32[2,1,32], index: 16, kind: input, shape index: {}]
  %s17 = inlined_call_operand.hbm [shape: f32[2,8,32], index: 17, kind: output, shape index: {}]
  %s18 = sld [smem:[#allocation0]]
  $region109: #{tpu_custom_call.1} parent=0
    _
  %s20 = ssub.s32 1, %s18
  %s21 = scalar_select 0, %s20, %s18
  $region1: #{tpu_custom_call.1} parent=0
    #allocation3 [shape = 'u8[8192]{0}', space=vmem, size = 0x2000, scoped, tag = 'output window, operand 0']
    #allocation4 [shape = 's32[2]{0}', space=sflag, size = 0x8, scoped, tag = 'scoped memory for tpu_custom_call.1']
    %22 = vsyncpa [#allocation4], 0
    %s23 = scalar_lea.sflag [#allocation4], 1
    %24 = vsyncpa %s23, 0
    loop: start=0, step=1, limit=6
    $region2: #{tpu_custom_call.1} parent=1 // loop_pre_header
      _
    $region3: #{tpu_custom_call.1} parent=1 // loop_header
      %s26 = sphi 0, %s30
      %p27 = scmp.ge.s32.totalorder %s26, 6
      %s33 = sphi 0, %s45
      %s34 = sphi 0, %s41
      %s35 = sphi 0, %s33
      %s36 = sphi 0, %s34
      %s37 = sphi 0, %s35
      %s38 = sphi 0, %s36
      %s48 = sphi 0, %s50
      %s51 = sphi 0, %s48
      %s52 = sphi 0, %s51
      %s68 = sphi 0, %s52
      %s74 = sphi 0, %s76
      %s77 = sphi 0, %s74
      %s78 = sphi 0, %s77
      %s94 = sphi 0, %s78
      %s100 = sphi 0, %s102
      %s103 = sphi 0, %s100
      %s104 = sphi 0, %s103
      %s120 = sphi 0, %s104
      %s126 = sphi 0, %s128
      %s129 = sphi 0, %s126
      %s130 = sphi 0, %s129
      %s146 = sphi 0, %s130
      %s152 = sphi 0, %s154
      %s155 = sphi 0, %s152
      %s156 = sphi 0, %s155
      %s172 = sphi 0, %s156
      %s178 = sphi 0, %s180
      %s181 = sphi 0, %s178
      %s182 = sphi 0, %s181
      %s198 = sphi 0, %s182
      %s204 = sphi 0, %s206
      %s207 = sphi 0, %s204
      %s208 = sphi 0, %s207
      %s224 = sphi 0, %s208
      %s230 = sphi 0, %s232
      %s233 = sphi 0, %s230
      %s234 = sphi 0, %s233
      %s250 = sphi 0, %s234
      %s256 = sphi 0, %s258
      %s259 = sphi 0, %s256
      %s260 = sphi 0, %s259
      %s276 = sphi 0, %s260
      %s282 = sphi 0, %s284
      %s285 = sphi 0, %s282
      %s286 = sphi 0, %s285
      %s302 = sphi 0, %s286
      %s308 = sphi 0, %s310
      %s311 = sphi 0, %s308
      %s312 = sphi 0, %s311
      %s328 = sphi 0, %s312
      %s334 = sphi 0, %s336
      %s337 = sphi 0, %s334
      %s338 = sphi 0, %s337
      %s354 = sphi 0, %s338
      %s360 = sphi 0, %s362
      %s363 = sphi 0, %s360
      %s364 = sphi 0, %s363
      %s380 = sphi 0, %s364
      %s386 = sphi 0, %s388
      %s389 = sphi 0, %s386
      %s390 = sphi 0, %s389
      %s406 = sphi 0, %s390
      %s412 = sphi 0, %s414
      %s415 = sphi 0, %s412
      %s416 = sphi 0, %s415
      %s432 = sphi 0, %s416
      %s438 = sphi 0, %s440
      %s441 = sphi 0, %s438
      %s442 = sphi 0, %s441
      %s458 = sphi 0, %s442
      %s464 = sphi 0, %s466
      %s467 = sphi 0, %s464
      %s468 = sphi 0, %s467
      %s484 = sphi 0, %s468
      %s490 = sphi 0, %s492
      %s493 = sphi 0, %s490
      %s494 = sphi 0, %s493
      %s510 = sphi 0, %s494
    $region4: #{tpu_custom_call.1} parent=1 // loop_header_branch
      %29 = sbr.rel (%p27) target = $region8
    $region5: #{tpu_custom_call.1} parent=1 // loop_body
      %s31 = ssub.s32 %s26, 1
      %s32 = ssub.s32 %s26, 2
      %s39 = sadd.s32 1, %s34
      %p40 = scmp.ge.s32.totalorder %s39, 2
      %s41 = scalar_select %p40, 0, %s39
      %s42 = sadd.s32 1, %s33
      %s43 = scalar_select %p40, %s42, %s33
      %p44 = scmp.ge.s32.totalorder %s43, 2
      %s45 = scalar_select %p44, 0, %s43
      %s46 = ssub.s32 %s33, %s45
      %p47 = scmp.eq.s32.totalorder %s46, 0
      %s49 = sadd.s32 %s48, 1
      %s50 = scalar_select %p47, %s48, %s49
      %p53 = pneg %p47
      %p54 = scmp.eq.s32.totalorder %s26, 3
      %p55 = por %p53, %p54
      %p56 = scmp.ne.s32.totalorder %s48, %s51
      %p57 = scmp.eq.s32.totalorder %s26, 0
      %p58 = por %p56, %p57
      %p59 = scmp.ne.s32.totalorder %s48, %s51
      %p60 = scmp.eq.s32.totalorder %s31, 3
      %p61 = por %p59, %p60
      %p62 = scmp.ne.s32.totalorder %s51, %s52
      %p63 = scmp.eq.s32.totalorder %s31, 0
      %p64 = por %p62, %p63
      %p65 = scmp.ne.s32.totalorder %s51, %s52
      %p66 = scmp.eq.s32.totalorder %s32, 3
      %p67 = por %p65, %p66
      %p69 = scmp.ne.s32.totalorder %s52, %s68
      %p70 = scmp.eq.s32.totalorder %s32, 0
      %p71 = por %p69, %p70
      %s72 = ssub.s32 %s34, %s41
      %p73 = scmp.eq.s32.totalorder %s72, 0
      %s75 = sadd.s32 %s74, 1
      %s76 = scalar_select %p73, %s74, %s75
      %p79 = pneg %p73
      %p80 = scmp.eq.s32.totalorder %s26, 3
      %p81 = por %p79, %p80
      %p82 = scmp.ne.s32.totalorder %s74, %s77
      %p83 = scmp.eq.s32.totalorder %s26, 0
      %p84 = por %p82, %p83
      %p85 = scmp.ne.s32.totalorder %s74, %s77
      %p86 = scmp.eq.s32.totalorder %s31, 3
      %p87 = por %p85, %p86
      %p88 = scmp.ne.s32.totalorder %s77, %s78
      %p89 = scmp.eq.s32.totalorder %s31, 0
      %p90 = por %p88, %p89
      %p91 = scmp.ne.s32.totalorder %s77, %s78
      %p92 = scmp.eq.s32.totalorder %s32, 3
      %p93 = por %p91, %p92
      %p95 = scmp.ne.s32.totalorder %s78, %s94
      %p96 = scmp.eq.s32.totalorder %s32, 0
      %p97 = por %p95, %p96
      %s98 = ssub.s32 %s34, %s41
      %p99 = scmp.eq.s32.totalorder %s98, 0
      %s101 = sadd.s32 %s100, 1
      %s102 = scalar_select %p99, %s100, %s101
      %p105 = pneg %p99
      %p106 = scmp.eq.s32.totalorder %s26, 3
      %p107 = por %p105, %p106
      %p108 = scmp.ne.s32.totalorder %s100, %s103
      %p109 = scmp.eq.s32.totalorder %s26, 0
      %p110 = por %p108, %p109
      %p111 = scmp.ne.s32.totalorder %s100, %s103
      %p112 = scmp.eq.s32.totalorder %s31, 3
      %p113 = por %p111, %p112
      %p114 = scmp.ne.s32.totalorder %s103, %s104
      %p115 = scmp.eq.s32.totalorder %s31, 0
      %p116 = por %p114, %p115
      %p117 = scmp.ne.s32.totalorder %s103, %s104
      %p118 = scmp.eq.s32.totalorder %s32, 3
      %p119 = por %p117, %p118
      %p121 = scmp.ne.s32.totalorder %s104, %s120
      %p122 = scmp.eq.s32.totalorder %s32, 0
      %p123 = por %p121, %p122
      %s124 = ssub.s32 %s34, %s41
      %p125 = scmp.eq.s32.totalorder %s124, 0
      %s127 = sadd.s32 %s126, 1
      %s128 = scalar_select %p125, %s126, %s127
      %p131 = pneg %p125
      %p132 = scmp.eq.s32.totalorder %s26, 3
      %p133 = por %p131, %p132
      %p134 = scmp.ne.s32.totalorder %s126, %s129
      %p135 = scmp.eq.s32.totalorder %s26, 0
      %p136 = por %p134, %p135
      %p137 = scmp.ne.s32.totalorder %s126, %s129
      %p138 = scmp.eq.s32.totalorder %s31, 3
      %p139 = por %p137, %p138
      %p140 = scmp.ne.s32.totalorder %s129, %s130
      %p141 = scmp.eq.s32.totalorder %s31, 0
      %p142 = por %p140, %p141
      %p143 = scmp.ne.s32.totalorder %s129, %s130
      %p144 = scmp.eq.s32.totalorder %s32, 3
      %p145 = por %p143, %p144
      %p147 = scmp.ne.s32.totalorder %s130, %s146
      %p148 = scmp.eq.s32.totalorder %s32, 0
      %p149 = por %p147, %p148
      %s150 = ssub.s32 %s34, %s41
      %p151 = scmp.eq.s32.totalorder %s150, 0
      %s153 = sadd.s32 %s152, 1
      %s154 = scalar_select %p151, %s152, %s153
      %p157 = pneg %p151
      %p158 = scmp.eq.s32.totalorder %s26, 3
      %p159 = por %p157, %p158
      %p160 = scmp.ne.s32.totalorder %s152, %s155
      %p161 = scmp.eq.s32.totalorder %s26, 0
      %p162 = por %p160, %p161
      %p163 = scmp.ne.s32.totalorder %s152, %s155
      %p164 = scmp.eq.s32.totalorder %s31, 3
      %p165 = por %p163, %p164
      %p166 = scmp.ne.s32.totalorder %s155, %s156
      %p167 = scmp.eq.s32.totalorder %s31, 0
      %p168 = por %p166, %p167
      %p169 = scmp.ne.s32.totalorder %s155, %s156
      %p170 = scmp.eq.s32.totalorder %s32, 3
      %p171 = por %p169, %p170
      %p173 = scmp.ne.s32.totalorder %s156, %s172
      %p174 = scmp.eq.s32.totalorder %s32, 0
      %p175 = por %p173, %p174
      %s176 = ssub.s32 %s34, %s41
      %p177 = scmp.eq.s32.totalorder %s176, 0
      %s179 = sadd.s32 %s178, 1
      %s180 = scalar_select %p177, %s178, %s179
      %p183 = pneg %p177
      %p184 = scmp.eq.s32.totalorder %s26, 3
      %p185 = por %p183, %p184
      %p186 = scmp.ne.s32.totalorder %s178, %s181
      %p187 = scmp.eq.s32.totalorder %s26, 0
      %p188 = por %p186, %p187
      %p189 = scmp.ne.s32.totalorder %s178, %s181
      %p190 = scmp.eq.s32.totalorder %s31, 3
      %p191 = por %p189, %p190
      %p192 = scmp.ne.s32.totalorder %s181, %s182
      %p193 = scmp.eq.s32.totalorder %s31, 0
      %p194 = por %p192, %p193
      %p195 = scmp.ne.s32.totalorder %s181, %s182
      %p196 = scmp.eq.s32.totalorder %s32, 3
      %p197 = por %p195, %p196
      %p199 = scmp.ne.s32.totalorder %s182, %s198
      %p200 = scmp.eq.s32.totalorder %s32, 0
      %p201 = por %p199, %p200
      %s202 = ssub.s32 %s34, %s41
      %p203 = scmp.eq.s32.totalorder %s202, 0
      %s205 = sadd.s32 %s204, 1
      %s206 = scalar_select %p203, %s204, %s205
      %p209 = pneg %p203
      %p210 = scmp.eq.s32.totalorder %s26, 3
      %p211 = por %p209, %p210
      %p212 = scmp.ne.s32.totalorder %s204, %s207
      %p213 = scmp.eq.s32.totalorder %s26, 0
      %p214 = por %p212, %p213
      %p215 = scmp.ne.s32.totalorder %s204, %s207
      %p216 = scmp.eq.s32.totalorder %s31, 3
      %p217 = por %p215, %p216
      %p218 = scmp.ne.s32.totalorder %s207, %s208
      %p219 = scmp.eq.s32.totalorder %s31, 0
      %p220 = por %p218, %p219
      %p221 = scmp.ne.s32.totalorder %s207, %s208
      %p222 = scmp.eq.s32.totalorder %s32, 3
      %p223 = por %p221, %p222
      %p225 = scmp.ne.s32.totalorder %s208, %s224
      %p226 = scmp.eq.s32.totalorder %s32, 0
      %p227 = por %p225, %p226
      %s228 = ssub.s32 %s34, %s41
      %p229 = scmp.eq.s32.totalorder %s228, 0
      %s231 = sadd.s32 %s230, 1
      %s232 = scalar_select %p229, %s230, %s231
      %p235 = pneg %p229
      %p236 = scmp.eq.s32.totalorder %s26, 3
      %p237 = por %p235, %p236
      %p238 = scmp.ne.s32.totalorder %s230, %s233
      %p239 = scmp.eq.s32.totalorder %s26, 0
      %p240 = por %p238, %p239
      %p241 = scmp.ne.s32.totalorder %s230, %s233
      %p242 = scmp.eq.s32.totalorder %s31, 3
      %p243 = por %p241, %p242
      %p244 = scmp.ne.s32.totalorder %s233, %s234
      %p245 = scmp.eq.s32.totalorder %s31, 0
      %p246 = por %p244, %p245
      %p247 = scmp.ne.s32.totalorder %s233, %s234
      %p248 = scmp.eq.s32.totalorder %s32, 3
      %p249 = por %p247, %p248
      %p251 = scmp.ne.s32.totalorder %s234, %s250
      %p252 = scmp.eq.s32.totalorder %s32, 0
      %p253 = por %p251, %p252
      %s254 = ssub.s32 %s34, %s41
      %p255 = scmp.eq.s32.totalorder %s254, 0
      %s257 = sadd.s32 %s256, 1
      %s258 = scalar_select %p255, %s256, %s257
      %p261 = pneg %p255
      %p262 = scmp.eq.s32.totalorder %s26, 3
      %p263 = por %p261, %p262
      %p264 = scmp.ne.s32.totalorder %s256, %s259
      %p265 = scmp.eq.s32.totalorder %s26, 0
      %p266 = por %p264, %p265
      %p267 = scmp.ne.s32.totalorder %s256, %s259
      %p268 = scmp.eq.s32.totalorder %s31, 3
      %p269 = por %p267, %p268
      %p270 = scmp.ne.s32.totalorder %s259, %s260
      %p271 = scmp.eq.s32.totalorder %s31, 0
      %p272 = por %p270, %p271
      %p273 = scmp.ne.s32.totalorder %s259, %s260
      %p274 = scmp.eq.s32.totalorder %s32, 3
      %p275 = por %p273, %p274
      %p277 = scmp.ne.s32.totalorder %s260, %s276
      %p278 = scmp.eq.s32.totalorder %s32, 0
      %p279 = por %p277, %p278
      %s280 = ssub.s32 %s34, %s41
      %p281 = scmp.eq.s32.totalorder %s280, 0
      %s283 = sadd.s32 %s282, 1
      %s284 = scalar_select %p281, %s282, %s283
      %p287 = pneg %p281
      %p288 = scmp.eq.s32.totalorder %s26, 3
      %p289 = por %p287, %p288
      %p290 = scmp.ne.s32.totalorder %s282, %s285
      %p291 = scmp.eq.s32.totalorder %s26, 0
      %p292 = por %p290, %p291
      %p293 = scmp.ne.s32.totalorder %s282, %s285
      %p294 = scmp.eq.s32.totalorder %s31, 3
      %p295 = por %p293, %p294
      %p296 = scmp.ne.s32.totalorder %s285, %s286
      %p297 = scmp.eq.s32.totalorder %s31, 0
      %p298 = por %p296, %p297
      %p299 = scmp.ne.s32.totalorder %s285, %s286
      %p300 = scmp.eq.s32.totalorder %s32, 3
      %p301 = por %p299, %p300
      %p303 = scmp.ne.s32.totalorder %s286, %s302
      %p304 = scmp.eq.s32.totalorder %s32, 0
      %p305 = por %p303, %p304
      %s306 = ssub.s32 %s34, %s41
      %p307 = scmp.eq.s32.totalorder %s306, 0
      %s309 = sadd.s32 %s308, 1
      %s310 = scalar_select %p307, %s308, %s309
      %p313 = pneg %p307
      %p314 = scmp.eq.s32.totalorder %s26, 3
      %p315 = por %p313, %p314
      %p316 = scmp.ne.s32.totalorder %s308, %s311
      %p317 = scmp.eq.s32.totalorder %s26, 0
      %p318 = por %p316, %p317
      %p319 = scmp.ne.s32.totalorder %s308, %s311
      %p320 = scmp.eq.s32.totalorder %s31, 3
      %p321 = por %p319, %p320
      %p322 = scmp.ne.s32.totalorder %s311, %s312
      %p323 = scmp.eq.s32.totalorder %s31, 0
      %p324 = por %p322, %p323
      %p325 = scmp.ne.s32.totalorder %s311, %s312
      %p326 = scmp.eq.s32.totalorder %s32, 3
      %p327 = por %p325, %p326
      %p329 = scmp.ne.s32.totalorder %s312, %s328
      %p330 = scmp.eq.s32.totalorder %s32, 0
      %p331 = por %p329, %p330
      %s332 = ssub.s32 %s34, %s41
      %p333 = scmp.eq.s32.totalorder %s332, 0
      %s335 = sadd.s32 %s334, 1
      %s336 = scalar_select %p333, %s334, %s335
      %p339 = pneg %p333
      %p340 = scmp.eq.s32.totalorder %s26, 3
      %p341 = por %p339, %p340
      %p342 = scmp.ne.s32.totalorder %s334, %s337
      %p343 = scmp.eq.s32.totalorder %s26, 0
      %p344 = por %p342, %p343
      %p345 = scmp.ne.s32.totalorder %s334, %s337
      %p346 = scmp.eq.s32.totalorder %s31, 3
      %p347 = por %p345, %p346
      %p348 = scmp.ne.s32.totalorder %s337, %s338
      %p349 = scmp.eq.s32.totalorder %s31, 0
      %p350 = por %p348, %p349
      %p351 = scmp.ne.s32.totalorder %s337, %s338
      %p352 = scmp.eq.s32.totalorder %s32, 3
      %p353 = por %p351, %p352
      %p355 = scmp.ne.s32.totalorder %s338, %s354
      %p356 = scmp.eq.s32.totalorder %s32, 0
      %p357 = por %p355, %p356
      %s358 = ssub.s32 %s34, %s41
      %p359 = scmp.eq.s32.totalorder %s358, 0
      %s361 = sadd.s32 %s360, 1
      %s362 = scalar_select %p359, %s360, %s361
      %p365 = pneg %p359
      %p366 = scmp.eq.s32.totalorder %s26, 3
      %p367 = por %p365, %p366
      %p368 = scmp.ne.s32.totalorder %s360, %s363
      %p369 = scmp.eq.s32.totalorder %s26, 0
      %p370 = por %p368, %p369
      %p371 = scmp.ne.s32.totalorder %s360, %s363
      %p372 = scmp.eq.s32.totalorder %s31, 3
      %p373 = por %p371, %p372
      %p374 = scmp.ne.s32.totalorder %s363, %s364
      %p375 = scmp.eq.s32.totalorder %s31, 0
      %p376 = por %p374, %p375
      %p377 = scmp.ne.s32.totalorder %s363, %s364
      %p378 = scmp.eq.s32.totalorder %s32, 3
      %p379 = por %p377, %p378
      %p381 = scmp.ne.s32.totalorder %s364, %s380
      %p382 = scmp.eq.s32.totalorder %s32, 0
      %p383 = por %p381, %p382
      %s384 = ssub.s32 %s34, %s41
      %p385 = scmp.eq.s32.totalorder %s384, 0
      %s387 = sadd.s32 %s386, 1
      %s388 = scalar_select %p385, %s386, %s387
      %p391 = pneg %p385
      %p392 = scmp.eq.s32.totalorder %s26, 3
      %p393 = por %p391, %p392
      %p394 = scmp.ne.s32.totalorder %s386, %s389
      %p395 = scmp.eq.s32.totalorder %s26, 0
      %p396 = por %p394, %p395
      %p397 = scmp.ne.s32.totalorder %s386, %s389
      %p398 = scmp.eq.s32.totalorder %s31, 3
      %p399 = por %p397, %p398
      %p400 = scmp.ne.s32.totalorder %s389, %s390
      %p401 = scmp.eq.s32.totalorder %s31, 0
      %p402 = por %p400, %p401
      %p403 = scmp.ne.s32.totalorder %s389, %s390
      %p404 = scmp.eq.s32.totalorder %s32, 3
      %p405 = por %p403, %p404
      %p407 = scmp.ne.s32.totalorder %s390, %s406
      %p408 = scmp.eq.s32.totalorder %s32, 0
      %p409 = por %p407, %p408
      %s410 = ssub.s32 %s34, %s41
      %p411 = scmp.eq.s32.totalorder %s410, 0
      %s413 = sadd.s32 %s412, 1
      %s414 = scalar_select %p411, %s412, %s413
      %p417 = pneg %p411
      %p418 = scmp.eq.s32.totalorder %s26, 3
      %p419 = por %p417, %p418
      %p420 = scmp.ne.s32.totalorder %s412, %s415
      %p421 = scmp.eq.s32.totalorder %s26, 0
      %p422 = por %p420, %p421
      %p423 = scmp.ne.s32.totalorder %s412, %s415
      %p424 = scmp.eq.s32.totalorder %s31, 3
      %p425 = por %p423, %p424
      %p426 = scmp.ne.s32.totalorder %s415, %s416
      %p427 = scmp.eq.s32.totalorder %s31, 0
      %p428 = por %p426, %p427
      %p429 = scmp.ne.s32.totalorder %s415, %s416
      %p430 = scmp.eq.s32.totalorder %s32, 3
      %p431 = por %p429, %p430
      %p433 = scmp.ne.s32.totalorder %s416, %s432
      %p434 = scmp.eq.s32.totalorder %s32, 0
      %p435 = por %p433, %p434
      %s436 = ssub.s32 %s34, %s41
      %p437 = scmp.eq.s32.totalorder %s436, 0
      %s439 = sadd.s32 %s438, 1
      %s440 = scalar_select %p437, %s438, %s439
      %p443 = pneg %p437
      %p444 = scmp.eq.s32.totalorder %s26, 3
      %p445 = por %p443, %p444
      %p446 = scmp.ne.s32.totalorder %s438, %s441
      %p447 = scmp.eq.s32.totalorder %s26, 0
      %p448 = por %p446, %p447
      %p449 = scmp.ne.s32.totalorder %s438, %s441
      %p450 = scmp.eq.s32.totalorder %s31, 3
      %p451 = por %p449, %p450
      %p452 = scmp.ne.s32.totalorder %s441, %s442
      %p453 = scmp.eq.s32.totalorder %s31, 0
      %p454 = por %p452, %p453
      %p455 = scmp.ne.s32.totalorder %s441, %s442
      %p456 = scmp.eq.s32.totalorder %s32, 3
      %p457 = por %p455, %p456
      %p459 = scmp.ne.s32.totalorder %s442, %s458
      %p460 = scmp.eq.s32.totalorder %s32, 0
      %p461 = por %p459, %p460
      %s462 = ssub.s32 %s34, %s41
      %p463 = scmp.eq.s32.totalorder %s462, 0
      %s465 = sadd.s32 %s464, 1
      %s466 = scalar_select %p463, %s464, %s465
      %p469 = pneg %p463
      %p470 = scmp.eq.s32.totalorder %s26, 3
      %p471 = por %p469, %p470
      %p472 = scmp.ne.s32.totalorder %s464, %s467
      %p473 = scmp.eq.s32.totalorder %s26, 0
      %p474 = por %p472, %p473
      %p475 = scmp.ne.s32.totalorder %s464, %s467
      %p476 = scmp.eq.s32.totalorder %s31, 3
      %p477 = por %p475, %p476
      %p478 = scmp.ne.s32.totalorder %s467, %s468
      %p479 = scmp.eq.s32.totalorder %s31, 0
      %p480 = por %p478, %p479
      %p481 = scmp.ne.s32.totalorder %s467, %s468
      %p482 = scmp.eq.s32.totalorder %s32, 3
      %p483 = por %p481, %p482
      %p485 = scmp.ne.s32.totalorder %s468, %s484
      %p486 = scmp.eq.s32.totalorder %s32, 0
      %p487 = por %p485, %p486
      %s488 = ssub.s32 %s33, %s45
      %p489 = scmp.eq.s32.totalorder %s488, 0
      %s491 = sadd.s32 %s490, 1
      %s492 = scalar_select %p489, %s490, %s491
      %p495 = pneg %p489
      %p496 = scmp.eq.s32.totalorder %s26, 3
      %p497 = por %p495, %p496
      %p498 = scmp.ne.s32.totalorder %s490, %s493
      %p499 = scmp.eq.s32.totalorder %s26, 0
      %p500 = por %p498, %p499
      %p501 = scmp.ne.s32.totalorder %s490, %s493
      %p502 = scmp.eq.s32.totalorder %s31, 3
      %p503 = por %p501, %p502
      %p504 = scmp.ne.s32.totalorder %s493, %s494
      %p505 = scmp.eq.s32.totalorder %s31, 0
      %p506 = por %p504, %p505
      %p507 = scmp.ne.s32.totalorder %s493, %s494
      %p508 = scmp.eq.s32.totalorder %s32, 3
      %p509 = por %p507, %p508
      %p511 = scmp.ne.s32.totalorder %s494, %s510
      %p512 = scmp.eq.s32.totalorder %s32, 0
      %p513 = por %p511, %p512
      %p514 = scmp.le.s32.totalorder 1, %s26
      %p515 = scmp.lt.s32.totalorder %s26, 5
      %p516 = pnand %p514, %p515
      %p517 = pneg %p516
      // Predicated region
      $region9: #{tpu_custom_call.1} parent=5 // pred_check
        _
      $region10: #{tpu_custom_call.1} parent=5 // pred_check_branch
        %519 = sbr.rel (%p516) target = $region12
      $region11: #{tpu_custom_call.1} parent=5 // pred_region
        %s520 = ssub.s32 %s26, 1
      $region12: #{tpu_custom_call.1} parent=5 // pred_fallthru
        _
      %p521 = scmp.lt.s32.totalorder %s26, 4
      // Predicated region
      $region13: #{tpu_custom_call.1} parent=5 // pred_check
        %p522 = pneg %p521
      $region14: #{tpu_custom_call.1} parent=5 // pred_check_branch
        %524 = sbr.rel (%p522) target = $region16
      $region15: #{tpu_custom_call.1} parent=5 // pred_region
        // Predicated region
        $region17: #{tpu_custom_call.1} parent=15 // pred_check
          %p525 = pneg %p58
        $region18: #{tpu_custom_call.1} parent=15 // pred_check_branch
          %527 = sbr.rel (%p525) target = $region20
        $region19: #{tpu_custom_call.1} parent=15 // pred_region
          %p528 = scmp.lt.s32.totalorder %s33, 1
          %s529 = scalar_select %p528, %s33, 1
          %s530 = smul.addr %s529, 8
          %s531 = scalar_lea.vmem %s0, %s530
        $region20: #{tpu_custom_call.1} parent=15 // pred_fallthru
          _
        // Predicated region
        $region21: #{tpu_custom_call.1} parent=15 // pred_check
          %p532 = pneg %p84
        $region22: #{tpu_custom_call.1} parent=15 // pred_check_branch
          %534 = sbr.rel (%p532) target = $region24
        $region23: #{tpu_custom_call.1} parent=15 // pred_region
          %p535 = scmp.lt.s32.totalorder %s34, 1
          %s536 = scalar_select %p535, %s34, 1
          %s537 = scalar_lea.vmem %s1, %s536
        $region24: #{tpu_custom_call.1} parent=15 // pred_fallthru
          _
        // Predicated region
        $region25: #{tpu_custom_call.1} parent=15 // pred_check
          %p538 = pneg %p110
        $region26: #{tpu_custom_call.1} parent=15 // pred_check_branch
          %540 = sbr.rel (%p538) target = $region28
        $region27: #{tpu_custom_call.1} parent=15 // pred_region
          %p541 = scmp.lt.s32.totalorder %s34, 1
          %s542 = scalar_select %p541, %s34, 1
          %s543 = scalar_lea.vmem %s2, %s542
        $region28: #{tpu_custom_call.1} parent=15 // pred_fallthru
          _
        // Predicated region
        $region29: #{tpu_custom_call.1} parent=15 // pred_check
          %p544 = pneg %p136
        $region30: #{tpu_custom_call.1} parent=15 // pred_check_branch
          %546 = sbr.rel (%p544) target = $region32
        $region31: #{tpu_custom_call.1} parent=15 // pred_region
          %p547 = scmp.lt.s32.totalorder %s34, 1
          %s548 = scalar_select %p547, %s34, 1
          %s549 = smul.addr %s548, 16
          %s550 = smul.addr %s549, 4
          %s551 = scalar_lea.vmem %s3, %s550
        $region32: #{tpu_custom_call.1} parent=15 // pred_fallthru
          _
        // Predicated region
        $region33: #{tpu_custom_call.1} parent=15 // pred_check
          %p552 = pneg %p162
        $region34: #{tpu_custom_call.1} parent=15 // pred_check_branch
          %554 = sbr.rel (%p552) target = $region36
        $region35: #{tpu_custom_call.1} parent=15 // pred_region
          %p555 = scmp.lt.s32.totalorder %s34, 1
          %s556 = scalar_select %p555, %s34, 1
          %s557 = smul.addr %s556, 16
          %s558 = smul.addr %s557, 4
          %s559 = scalar_lea.vmem %s4, %s558
        $region36: #{tpu_custom_call.1} parent=15 // pred_fallthru
          _
        // Predicated region
        $region37: #{tpu_custom_call.1} parent=15 // pred_check
          %p560 = pneg %p188
        $region38: #{tpu_custom_call.1} parent=15 // pred_check_branch
          %562 = sbr.rel (%p560) target = $region40
        $region39: #{tpu_custom_call.1} parent=15 // pred_region
          %p563 = scmp.lt.s32.totalorder %s34, 1
          %s564 = scalar_select %p563, %s34, 1
          %s565 = smul.addr %s564, 16
          %s566 = smul.addr %s565, 4
          %s567 = scalar_lea.vmem %s5, %s566
        $region40: #{tpu_custom_call.1} parent=15 // pred_fallthru
          _
        // Predicated region
        $region41: #{tpu_custom_call.1} parent=15 // pred_check
          %p568 = pneg %p214
        $region42: #{tpu_custom_call.1} parent=15 // pred_check_branch
          %570 = sbr.rel (%p568) target = $region44
        $region43: #{tpu_custom_call.1} parent=15 // pred_region
          %p571 = scmp.lt.s32.totalorder %s34, 1
          %s572 = scalar_select %p571, %s34, 1
          %s573 = smul.addr %s572, 4
          %s574 = scalar_lea.vmem %s6, %s573
        $region44: #{tpu_custom_call.1} parent=15 // pred_fallthru
          _
        // Predicated region
        $region45: #{tpu_custom_call.1} parent=15 // pred_check
          %p575 = pneg %p240
        $region46: #{tpu_custom_call.1} parent=15 // pred_check_branch
          %577 = sbr.rel (%p575) target = $region48
        $region47: #{tpu_custom_call.1} parent=15 // pred_region
          %p578 = scmp.lt.s32.totalorder %s34, 1
          %s579 = scalar_select %p578, %s34, 1
          %s580 = smul.addr %s579, 4
          %s581 = scalar_lea.vmem %s7, %s580
        $region48: #{tpu_custom_call.1} parent=15 // pred_fallthru
          _
        // Predicated region
        $region49: #{tpu_custom_call.1} parent=15 // pred_check
          %p582 = pneg %p266
        $region50: #{tpu_custom_call.1} parent=15 // pred_check_branch
          %584 = sbr.rel (%p582) target = $region52
        $region51: #{tpu_custom_call.1} parent=15 // pred_region
          %p585 = scmp.lt.s32.totalorder %s34, 1
          %s586 = scalar_select %p585, %s34, 1
          %s587 = smul.addr %s586, 4
          %s588 = scalar_lea.vmem %s8, %s587
        $region52: #{tpu_custom_call.1} parent=15 // pred_fallthru
          _
        // Predicated region
        $region53: #{tpu_custom_call.1} parent=15 // pred_check
          %p589 = pneg %p292
        $region54: #{tpu_custom_call.1} parent=15 // pred_check_branch
          %591 = sbr.rel (%p589) target = $region56
        $region55: #{tpu_custom_call.1} parent=15 // pred_region
          %p592 = scmp.lt.s32.totalorder %s34, 1
          %s593 = scalar_select %p592, %s34, 1
          %s594 = smul.addr %s593, 4
          %s595 = smul.addr %s594, 4
          %s596 = scalar_lea.vmem %s9, %s595
        $region56: #{tpu_custom_call.1} parent=15 // pred_fallthru
          _
        // Predicated region
        $region57: #{tpu_custom_call.1} parent=15 // pred_check
          %p597 = pneg %p318
        $region58: #{tpu_custom_call.1} parent=15 // pred_check_branch
          %599 = sbr.rel (%p597) target = $region60
        $region59: #{tpu_custom_call.1} parent=15 // pred_region
          %p600 = scmp.lt.s32.totalorder %s34, 1
          %s601 = scalar_select %p600, %s34, 1
          %s602 = scalar_lea.vmem %s10, %s601
        $region60: #{tpu_custom_call.1} parent=15 // pred_fallthru
          _
        // Predicated region
        $region61: #{tpu_custom_call.1} parent=15 // pred_check
          %p603 = pneg %p344
        $region62: #{tpu_custom_call.1} parent=15 // pred_check_branch
          %605 = sbr.rel (%p603) target = $region64
        $region63: #{tpu_custom_call.1} parent=15 // pred_region
          %p606 = scmp.lt.s32.totalorder %s34, 1
          %s607 = scalar_select %p606, %s34, 1
          %s608 = scalar_lea.vmem %s11, %s607
        $region64: #{tpu_custom_call.1} parent=15 // pred_fallthru
          _
        // Predicated region
        $region65: #{tpu_custom_call.1} parent=15 // pred_check
          %p609 = pneg %p370
        $region66: #{tpu_custom_call.1} parent=15 // pred_check_branch
          %611 = sbr.rel (%p609) target = $region68
        $region67: #{tpu_custom_call.1} parent=15 // pred_region
          %p612 = scmp.lt.s32.totalorder %s34, 1
          %s613 = scalar_select %p612, %s34, 1
          %s614 = scalar_lea.vmem %s12, %s613
        $region68: #{tpu_custom_call.1} parent=15 // pred_fallthru
          _
        // Predicated region
        $region69: #{tpu_custom_call.1} parent=15 // pred_check
          %p615 = pneg %p396
        $region70: #{tpu_custom_call.1} parent=15 // pred_check_branch
          %617 = sbr.rel (%p615) target = $region72
        $region71: #{tpu_custom_call.1} parent=15 // pred_region
          %p618 = scmp.lt.s32.totalorder %s34, 1
          %s619 = scalar_select %p618, %s34, 1
          %s620 = smul.addr %s619, 4
          %s621 = smul.addr %s620, 4
          %s622 = scalar_lea.vmem %s13, %s621
        $region72: #{tpu_custom_call.1} parent=15 // pred_fallthru
          _
        // Predicated region
        $region73: #{tpu_custom_call.1} parent=15 // pred_check
          %p623 = pneg %p422
        $region74: #{tpu_custom_call.1} parent=15 // pred_check_branch
          %625 = sbr.rel (%p623) target = $region76
        $region75: #{tpu_custom_call.1} parent=15 // pred_region
          %p626 = scmp.lt.s32.totalorder %s34, 1
          %s627 = scalar_select %p626, %s34, 1
          %s628 = scalar_lea.vmem %s14, %s627
        $region76: #{tpu_custom_call.1} parent=15 // pred_fallthru
          _
        // Predicated region
        $region77: #{tpu_custom_call.1} parent=15 // pred_check
          %p629 = pneg %p448
        $region78: #{tpu_custom_call.1} parent=15 // pred_check_branch
          %631 = sbr.rel (%p629) target = $region80
        $region79: #{tpu_custom_call.1} parent=15 // pred_region
          %p632 = scmp.lt.s32.totalorder %s34, 1
          %s633 = scalar_select %p632, %s34, 1
          %s634 = smul.addr %s633, 8
          %s635 = smul.addr %s634, 4
          %s636 = scalar_lea.vmem %s15, %s635
        $region80: #{tpu_custom_call.1} parent=15 // pred_fallthru
          _
        // Predicated region
        $region81: #{tpu_custom_call.1} parent=15 // pred_check
          %p637 = pneg %p474
        $region82: #{tpu_custom_call.1} parent=15 // pred_check_branch
          %639 = sbr.rel (%p637) target = $region84
        $region83: #{tpu_custom_call.1} parent=15 // pred_region
          %p640 = scmp.lt.s32.totalorder %s34, 1
          %s641 = scalar_select %p640, %s34, 1
          %s642 = scalar_lea.vmem %s16, %s641
        $region84: #{tpu_custom_call.1} parent=15 // pred_fallthru
          _
      $region16: #{tpu_custom_call.1} parent=5 // pred_fallthru
        _
      %p643 = scmp.le.s32.totalorder 1, %s26
      %p644 = scmp.lt.s32.totalorder %s26, 5
      %p645 = pnand %p643, %p644
      %p646 = pneg %p645
      // Predicated region
      $region85: #{tpu_custom_call.1} parent=5 // pred_check
        _
      $region86: #{tpu_custom_call.1} parent=5 // pred_check_branch
        %648 = sbr.rel (%p645) target = $region88
      $region87: #{tpu_custom_call.1} parent=5 // pred_region
        %s649 = ssub.s32 %s26, 1
        %p650 = scmp.lt.s32.totalorder %s35, 1
        %s651 = scalar_select %p650, %s35, 1
        %s652 = smul.addr %s651, 8
        %s653 = scalar_lea.vmem %s0, %s652
        %p654 = pneg %p64
        %p655 = pneg %p61
        %p656 = scmp.lt.s32.totalorder %s36, 1
        %s657 = scalar_select %p656, %s36, 1
        %s658 = scalar_lea.vmem %s1, %s657
        %p659 = pneg %p90
        %p660 = pneg %p87
        %p661 = scmp.lt.s32.totalorder %s36, 1
        %s662 = scalar_select %p661, %s36, 1
        %s663 = scalar_lea.vmem %s2, %s662
        %p664 = pneg %p116
        %p665 = pneg %p113
        %p666 = scmp.lt.s32.totalorder %s36, 1
        %s667 = scalar_select %p666, %s36, 1
        %s668 = smul.addr %s667, 16
        %s669 = smul.addr %s668, 4
        %s670 = scalar_lea.vmem %s3, %s669
        %p671 = pneg %p142
        %p672 = pneg %p139
        %p673 = scmp.lt.s32.totalorder %s36, 1
        %s674 = scalar_select %p673, %s36, 1
        %s675 = smul.addr %s674, 16
        %s676 = smul.addr %s675, 4
        %s677 = scalar_lea.vmem %s4, %s676
        %p678 = pneg %p168
        %p679 = pneg %p165
        %p680 = scmp.lt.s32.totalorder %s36, 1
        %s681 = scalar_select %p680, %s36, 1
        %s682 = smul.addr %s681, 16
        %s683 = smul.addr %s682, 4
        %s684 = scalar_lea.vmem %s5, %s683
        %p685 = pneg %p194
        %p686 = pneg %p191
        %p687 = scmp.lt.s32.totalorder %s36, 1
        %s688 = scalar_select %p687, %s36, 1
        %s689 = smul.addr %s688, 4
        %s690 = scalar_lea.vmem %s6, %s689
        %p691 = pneg %p220
        %p692 = pneg %p217
        %p693 = scmp.lt.s32.totalorder %s36, 1
        %s694 = scalar_select %p693, %s36, 1
        %s695 = smul.addr %s694, 4
        %s696 = scalar_lea.vmem %s7, %s695
        %p697 = pneg %p246
        %p698 = pneg %p243
        %p699 = scmp.lt.s32.totalorder %s36, 1
        %s700 = scalar_select %p699, %s36, 1
        %s701 = smul.addr %s700, 4
        %s702 = scalar_lea.vmem %s8, %s701
        %p703 = pneg %p272
        %p704 = pneg %p269
        %p705 = scmp.lt.s32.totalorder %s36, 1
        %s706 = scalar_select %p705, %s36, 1
        %s707 = smul.addr %s706, 4
        %s708 = smul.addr %s707, 4
        %s709 = scalar_lea.vmem %s9, %s708
        %p710 = pneg %p298
        %p711 = pneg %p295
        %p712 = scmp.lt.s32.totalorder %s36, 1
        %s713 = scalar_select %p712, %s36, 1
        %s714 = scalar_lea.vmem %s10, %s713
        %p715 = pneg %p324
        %p716 = pneg %p321
        %p717 = scmp.lt.s32.totalorder %s36, 1
        %s718 = scalar_select %p717, %s36, 1
        %s719 = scalar_lea.vmem %s11, %s718
        %p720 = pneg %p350
        %p721 = pneg %p347
        %p722 = scmp.lt.s32.totalorder %s36, 1
        %s723 = scalar_select %p722, %s36, 1
        %s724 = scalar_lea.vmem %s12, %s723
        %p725 = pneg %p376
        %p726 = pneg %p373
        %p727 = scmp.lt.s32.totalorder %s36, 1
        %s728 = scalar_select %p727, %s36, 1
        %s729 = smul.addr %s728, 4
        %s730 = smul.addr %s729, 4
        %s731 = scalar_lea.vmem %s13, %s730
        %p732 = pneg %p402
        %p733 = pneg %p399
        %p734 = scmp.lt.s32.totalorder %s36, 1
        %s735 = scalar_select %p734, %s36, 1
        %s736 = scalar_lea.vmem %s14, %s735
        %p737 = pneg %p428
        %p738 = pneg %p425
        %p739 = scmp.lt.s32.totalorder %s36, 1
        %s740 = scalar_select %p739, %s36, 1
        %s741 = smul.addr %s740, 8
        %s742 = smul.addr %s741, 4
        %s743 = scalar_lea.vmem %s15, %s742
        %p744 = pneg %p454
        %p745 = pneg %p451
        %p746 = scmp.lt.s32.totalorder %s36, 1
        %s747 = scalar_select %p746, %s36, 1
        %s748 = scalar_lea.vmem %s16, %s747
        %p749 = pneg %p480
        %p750 = pneg %p477
        %p751 = pneg %p506
        %p752 = pneg %p503
        %s753 = sand.u32 %s493, 1
        %s754 = scalar_lea.sflag [#allocation4], %s753
        %s755 = sand.u32 %s493, 1
        %s756 = smul.addr %s755, 8
        %s757 = scalar_lea.vmem [#allocation3], %s756
        %p758 = scmp.lt.s32.totalorder %s35, 1
        %s759 = scalar_select %p758, %s35, 1
        %s760 = smul.addr %s759, 8
        %s761 = scalar_lea.vmem %s0, %s760
        %p762 = scmp.lt.s32.totalorder %s36, 1
        %s763 = scalar_select %p762, %s36, 1
        %s764 = scalar_lea.vmem %s1, %s763
        %p765 = scmp.lt.s32.totalorder %s36, 1
        %s766 = scalar_select %p765, %s36, 1
        %s767 = scalar_lea.vmem %s2, %s766
        %p768 = scmp.lt.s32.totalorder %s36, 1
        %s769 = scalar_select %p768, %s36, 1
        %s770 = smul.addr %s769, 16
        %s771 = smul.addr %s770, 4
        %s772 = scalar_lea.vmem %s3, %s771
        %p773 = scmp.lt.s32.totalorder %s36, 1
        %s774 = scalar_select %p773, %s36, 1
        %s775 = smul.addr %s774, 16
        %s776 = smul.addr %s775, 4
        %s777 = scalar_lea.vmem %s4, %s776
        %p778 = scmp.lt.s32.totalorder %s36, 1
        %s779 = scalar_select %p778, %s36, 1
        %s780 = smul.addr %s779, 16
        %s781 = smul.addr %s780, 4
        %s782 = scalar_lea.vmem %s5, %s781
        %p783 = scmp.lt.s32.totalorder %s36, 1
        %s784 = scalar_select %p783, %s36, 1
        %s785 = smul.addr %s784, 4
        %s786 = scalar_lea.vmem %s6, %s785
        %p787 = scmp.lt.s32.totalorder %s36, 1
        %s788 = scalar_select %p787, %s36, 1
        %s789 = smul.addr %s788, 4
        %s790 = scalar_lea.vmem %s7, %s789
        %p791 = scmp.lt.s32.totalorder %s36, 1
        %s792 = scalar_select %p791, %s36, 1
        %s793 = smul.addr %s792, 4
        %s794 = scalar_lea.vmem %s8, %s793
        %p795 = scmp.lt.s32.totalorder %s36, 1
        %s796 = scalar_select %p795, %s36, 1
        %s797 = smul.addr %s796, 4
        %s798 = smul.addr %s797, 4
        %s799 = scalar_lea.vmem %s9, %s798
        %p800 = scmp.lt.s32.totalorder %s36, 1
        %s801 = scalar_select %p800, %s36, 1
        %s802 = scalar_lea.vmem %s10, %s801
        %p803 = scmp.lt.s32.totalorder %s36, 1
        %s804 = scalar_select %p803, %s36, 1
        %s805 = scalar_lea.vmem %s11, %s804
        %p806 = scmp.lt.s32.totalorder %s36, 1
        %s807 = scalar_select %p806, %s36, 1
        %s808 = scalar_lea.vmem %s12, %s807
        %p809 = scmp.lt.s32.totalorder %s36, 1
        %s810 = scalar_select %p809, %s36, 1
        %s811 = smul.addr %s810, 4
        %s812 = smul.addr %s811, 4
        %s813 = scalar_lea.vmem %s13, %s812
        %p814 = scmp.lt.s32.totalorder %s36, 1
        %s815 = scalar_select %p814, %s36, 1
        %s816 = scalar_lea.vmem %s14, %s815
        %p817 = scmp.lt.s32.totalorder %s36, 1
        %s818 = scalar_select %p817, %s36, 1
        %s819 = smul.addr %s818, 8
        %s820 = smul.addr %s819, 4
        %s821 = scalar_lea.vmem %s15, %s820
        %p822 = scmp.lt.s32.totalorder %s36, 1
        %s823 = scalar_select %p822, %s36, 1
        %s824 = scalar_lea.vmem %s16, %s823
        %p826 = scmp.eq.s32.totalorder %s36, 0
        // Predicated region
        $region89: #{tpu_custom_call.1} parent=87 // pred_check
          %p827 = pneg %p826
        $region90: #{tpu_custom_call.1} parent=87 // pred_check_branch
          %829 = sbr.rel (%p827) target = $region92
        $region91: #{tpu_custom_call.1} parent=87 // pred_region
          %v830 = vld [vmem:[%s761] sm:$0xff]
          %vm831 = vcmask 261120
          %832 = vst.msk [vmem:[#allocation2] sm:$0xff] %vm831, %v830
        $region92: #{tpu_custom_call.1} parent=87 // pred_fallthru
          _
        %v833 = vld [vmem:[#allocation2] sm:$0xff]
        %v834 = vld [vmem:[%s764] sm:$0x1]
        %v835 = vld [vmem:[%s767] sm:$0x1]
        %vm836 = vcmask 261120
        %v837 = vsel %vm836, %v833, 0.0
        %838 = vadd.xlane.f32.xlu0 %v837
        %v839 = vpop.xlane.xlu0 %838
        %v840 = vrcp.pop 32.0
        %v841 = vmul.f32 %v839, %v840
        %v842 = vsub.f32 %v833, %v841
        %v843 = vmul.f32 %v842, %v842
        %v844 = vsel %vm836, %v843, 0.0
        %845 = vadd.xlane.f32.xlu0 %v844
        %v846 = vpop.xlane.xlu0 %845
        %v847 = vmul.f32 %v846, %v840
        %v848 = vadd.f32 %v847, 1e-05
        %v849 = vrsqrt.pop %v848
        %v850 = vmul.f32 %v842, %v849
        %v852 = vlaneseq
        %v853 = vshrl.u32 %v852, 7
        %v854 = vsub.s32 0, %v853
        %v855 = vrot.slane %v834, %v854
        %v857 = vmul.f32 %v850, %v855
        %v859 = vlaneseq
        %v860 = vshrl.u32 %v859, 7
        %v861 = vsub.s32 0, %v860
        %v862 = vrot.slane %v835, %v861
        %v864 = vadd.f32 %v857, %v862
        %v865 = vpack.c.bf16 %v864, %v864
        %v866 = vld [vmem:[%s772] sm:$0xf]
        %v867 = vld [vmem:[%s772 + $0x4] sm:$0xf]
        %v868 = vld [vmem:[%s772 + $0x8] sm:$0xf]
        %v869 = vld [vmem:[%s772 + $0xc] sm:$0xf]
        %v870 = vld [vmem:[%s772 + $0x10] sm:$0xf]
        %v871 = vld [vmem:[%s772 + $0x14] sm:$0xf]
        %v872 = vld [vmem:[%s772 + $0x18] sm:$0xf]
        %v873 = vld [vmem:[%s772 + $0x1c] sm:$0xf]
        %v874 = vld [vmem:[%s772 + $0x20] sm:$0xf]
        %v875 = vld [vmem:[%s772 + $0x24] sm:$0xf]
        %v876 = vld [vmem:[%s772 + $0x28] sm:$0xf]
        %v877 = vld [vmem:[%s772 + $0x2c] sm:$0xf]
        %v878 = vld [vmem:[%s772 + $0x30] sm:$0xf]
        %v879 = vld [vmem:[%s772 + $0x34] sm:$0xf]
        %v880 = vld [vmem:[%s772 + $0x38] sm:$0xf]
        %v881 = vld [vmem:[%s772 + $0x3c] sm:$0xf]
        %v882 = vld [vmem:[%s786] sm:$0x1]
        %v883 = vld [vmem:[%s786 + $0x1] sm:$0x1]
        %v884 = vld [vmem:[%s786 + $0x2] sm:$0x1]
        %v885 = vld [vmem:[%s786 + $0x3] sm:$0x1]
        %v890 = vlaneseq
        %v891 = vshrl.u32 %v890, 7
        %v892 = vsub.s32 0, %v891
        %v893 = vrot.slane %v882, %v892
        %v894 = vlaneseq
        %v895 = vshrl.u32 %v894, 7
        %v896 = vsub.s32 0, %v895
        %v897 = vrot.slane %v883, %v896
        %v898 = vlaneseq
        %v899 = vshrl.u32 %v898, 7
        %v900 = vsub.s32 0, %v899
        %v901 = vrot.slane %v884, %v900
        %v902 = vlaneseq
        %v903 = vshrl.u32 %v902, 7
        %v904 = vsub.s32 0, %v903
        %v905 = vrot.slane %v885, %v904
        %v914 = vunpack.c.l.b16 %v866
        %v915 = vunpack.c.l.b16 %v867
        %v916 = vunpack.c.l.b16 %v868
        %v917 = vunpack.c.l.b16 %v869
        %v918 = vpack.c.b16 %v915, %v914
        %v919 = vpack.c.b16 %v917, %v916
        %v923 = vsel %vm836, %v865, 0
        %925 = vmatprep.subr.bf16.mxu0 0
        %926 = vmatpush1.bf16.msra.mxu0 %v918
        %927 = vmatprep.subr.bf16.mxu0 0
        %928 = vmatpush1.bf16.msra.mxu0 %v919
        %929 = vmatprep.subr.bf16.mxu0 0
        %930 = vmatpush1.bf16.msra.mxu0 0
        %931 = vmatprep.subr.bf16.mxu0 0
        %932 = vmatpush1.bf16.msra.mxu0 0
        %933 = vmatprep.subr.bf16.mxu0 0
        %934 = vmatpush1.bf16.msra.mxu0 0
        %935 = vmatprep.subr.bf16.mxu0 0
        %936 = vmatpush1.bf16.msra.mxu0 0
        %937 = vmatprep.subr.bf16.mxu0 0
        %938 = vmatpush1.bf16.msra.mxu0 0
        %939 = vmatprep.subr.bf16.mxu0 0
        %940 = vmatpush1.bf16.msra.mxu0 0
        %941 = vmatprep.subr.bf16.mxu0 0
        %942 = vmatpush1.bf16.msra.mxu0 0
        %943 = vmatprep.subr.bf16.mxu0 0
        %944 = vmatpush1.bf16.msra.mxu0 0
        %945 = vmatprep.subr.bf16.mxu0 0
        %946 = vmatpush1.bf16.msra.mxu0 0
        %947 = vmatprep.subr.bf16.mxu0 0
        %948 = vmatpush1.bf16.msra.mxu0 0
        %949 = vmatprep.subr.bf16.mxu0 0
        %950 = vmatpush1.bf16.msra.mxu0 0
        %951 = vmatprep.subr.bf16.mxu0 0
        %952 = vmatpush1.bf16.msra.mxu0 0
        %953 = vmatprep.subr.bf16.mxu0 0
        %954 = vmatpush1.bf16.msra.mxu0 0
        %955 = vmatprep.subr.bf16.mxu0 0
        %956 = vmatpush1.bf16.msra.mxu0 0
        %957 = vmatprep.mubr.bf16.mxu0 0
        %958 = vmatmul.mubr.bf16.gmra.mrb[0].mxu0 %v923
        %v959 = vpop.f32.mrb[0].mxu0
        %v960 = vadd.f32 %v893, %v959
        %v961 = vpop.f32.mrb[0].mxu0
        %v962 = vpop.f32.mrb[0].mxu0
        %v963 = vpop.f32.mrb[0].mxu0
        %964 = vdwg.mxu0
        %v969 = vunpack.c.l.b16 %v870
        %v970 = vunpack.c.l.b16 %v871
        %v971 = vunpack.c.l.b16 %v872
        %v972 = vunpack.c.l.b16 %v873
        %v973 = vpack.c.b16 %v970, %v969
        %v974 = vpack.c.b16 %v972, %v971
        %977 = vmatprep.subr.bf16.mxu0 0
        %978 = vmatpush1.bf16.msra.mxu0 %v973
        %979 = vmatprep.subr.bf16.mxu0 0
        %980 = vmatpush1.bf16.msra.mxu0 %v974
        %981 = vmatprep.subr.bf16.mxu0 0
        %982 = vmatpush1.bf16.msra.mxu0 0
        %983 = vmatprep.subr.bf16.mxu0 0
        %984 = vmatpush1.bf16.msra.mxu0 0
        %985 = vmatprep.subr.bf16.mxu0 0
        %986 = vmatpush1.bf16.msra.mxu0 0
        %987 = vmatprep.subr.bf16.mxu0 0
        %988 = vmatpush1.bf16.msra.mxu0 0
        %989 = vmatprep.subr.bf16.mxu0 0
        %990 = vmatpush1.bf16.msra.mxu0 0
        %991 = vmatprep.subr.bf16.mxu0 0
        %992 = vmatpush1.bf16.msra.mxu0 0
        %993 = vmatprep.subr.bf16.mxu0 0
        %994 = vmatpush1.bf16.msra.mxu0 0
        %995 = vmatprep.subr.bf16.mxu0 0
        %996 = vmatpush1.bf16.msra.mxu0 0
        %997 = vmatprep.subr.bf16.mxu0 0
        %998 = vmatpush1.bf16.msra.mxu0 0
        %999 = vmatprep.subr.bf16.mxu0 0
        %1000 = vmatpush1.bf16.msra.mxu0 0
        %1001 = vmatprep.subr.bf16.mxu0 0
        %1002 = vmatpush1.bf16.msra.mxu0 0
        %1003 = vmatprep.subr.bf16.mxu0 0
        %1004 = vmatpush1.bf16.msra.mxu0 0
        %1005 = vmatprep.subr.bf16.mxu0 0
        %1006 = vmatpush1.bf16.msra.mxu0 0
        %1007 = vmatprep.subr.bf16.mxu0 0
        %1008 = vmatpush1.bf16.msra.mxu0 0
        %1009 = vmatprep.mubr.bf16.mxu0 0
        %1010 = vmatmul.mubr.bf16.gmra.mrb[0].mxu0 %v923
        %v1011 = vpop.f32.mrb[0].mxu0
        %v1012 = vadd.f32 %v897, %v1011
        %v1013 = vpop.f32.mrb[0].mxu0
        %v1014 = vpop.f32.mrb[0].mxu0
        %v1015 = vpop.f32.mrb[0].mxu0
        %1016 = vdwg.mxu0
        %v1021 = vunpack.c.l.b16 %v874
        %v1022 = vunpack.c.l.b16 %v875
        %v1023 = vunpack.c.l.b16 %v876
        %v1024 = vunpack.c.l.b16 %v877
        %v1025 = vpack.c.b16 %v1022, %v1021
        %v1026 = vpack.c.b16 %v1024, %v1023
        %1029 = vmatprep.subr.bf16.mxu0 0
        %1030 = vmatpush1.bf16.msra.mxu0 %v1025
        %1031 = vmatprep.subr.bf16.mxu0 0
        %1032 = vmatpush1.bf16.msra.mxu0 %v1026
        %1033 = vmatprep.subr.bf16.mxu0 0
        %1034 = vmatpush1.bf16.msra.mxu0 0
        %1035 = vmatprep.subr.bf16.mxu0 0
        %1036 = vmatpush1.bf16.msra.mxu0 0
        %1037 = vmatprep.subr.bf16.mxu0 0
        %1038 = vmatpush1.bf16.msra.mxu0 0
        %1039 = vmatprep.subr.bf16.mxu0 0
        %1040 = vmatpush1.bf16.msra.mxu0 0
        %1041 = vmatprep.subr.bf16.mxu0 0
        %1042 = vmatpush1.bf16.msra.mxu0 0
        %1043 = vmatprep.subr.bf16.mxu0 0
        %1044 = vmatpush1.bf16.msra.mxu0 0
        %1045 = vmatprep.subr.bf16.mxu0 0
        %1046 = vmatpush1.bf16.msra.mxu0 0
        %1047 = vmatprep.subr.bf16.mxu0 0
        %1048 = vmatpush1.bf16.msra.mxu0 0
        %1049 = vmatprep.subr.bf16.mxu0 0
        %1050 = vmatpush1.bf16.msra.mxu0 0
        %1051 = vmatprep.subr.bf16.mxu0 0
        %1052 = vmatpush1.bf16.msra.mxu0 0
        %1053 = vmatprep.subr.bf16.mxu0 0
        %1054 = vmatpush1.bf16.msra.mxu0 0
        %1055 = vmatprep.subr.bf16.mxu0 0
        %1056 = vmatpush1.bf16.msra.mxu0 0
        %1057 = vmatprep.subr.bf16.mxu0 0
        %1058 = vmatpush1.bf16.msra.mxu0 0
        %1059 = vmatprep.subr.bf16.mxu0 0
        %1060 = vmatpush1.bf16.msra.mxu0 0
        %1061 = vmatprep.mubr.bf16.mxu0 0
        %1062 = vmatmul.mubr.bf16.gmra.mrb[0].mxu0 %v923
        %v1063 = vpop.f32.mrb[0].mxu0
        %v1064 = vadd.f32 %v901, %v1063
        %v1065 = vpop.f32.mrb[0].mxu0
        %v1066 = vpop.f32.mrb[0].mxu0
        %v1067 = vpop.f32.mrb[0].mxu0
        %1068 = vdwg.mxu0
        %v1073 = vunpack.c.l.b16 %v878
        %v1074 = vunpack.c.l.b16 %v879
        %v1075 = vunpack.c.l.b16 %v880
        %v1076 = vunpack.c.l.b16 %v881
        %v1077 = vpack.c.b16 %v1074, %v1073
        %v1078 = vpack.c.b16 %v1076, %v1075
        %1081 = vmatprep.subr.bf16.mxu0 0
        %1082 = vmatpush1.bf16.msra.mxu0 %v1077
        %1083 = vmatprep.subr.bf16.mxu0 0
        %1084 = vmatpush1.bf16.msra.mxu0 %v1078
        %1085 = vmatprep.subr.bf16.mxu0 0
        %1086 = vmatpush1.bf16.msra.mxu0 0
        %1087 = vmatprep.subr.bf16.mxu0 0
        %1088 = vmatpush1.bf16.msra.mxu0 0
        %1089 = vmatprep.subr.bf16.mxu0 0
        %1090 = vmatpush1.bf16.msra.mxu0 0
        %1091 = vmatprep.subr.bf16.mxu0 0
        %1092 = vmatpush1.bf16.msra.mxu0 0
        %1093 = vmatprep.subr.bf16.mxu0 0
        %1094 = vmatpush1.bf16.msra.mxu0 0
        %1095 = vmatprep.subr.bf16.mxu0 0
        %1096 = vmatpush1.bf16.msra.mxu0 0
        %1097 = vmatprep.subr.bf16.mxu0 0
        %1098 = vmatpush1.bf16.msra.mxu0 0
        %1099 = vmatprep.subr.bf16.mxu0 0
        %1100 = vmatpush1.bf16.msra.mxu0 0
        %1101 = vmatprep.subr.bf16.mxu0 0
        %1102 = vmatpush1.bf16.msra.mxu0 0
        %1103 = vmatprep.subr.bf16.mxu0 0
        %1104 = vmatpush1.bf16.msra.mxu0 0
        %1105 = vmatprep.subr.bf16.mxu0 0
        %1106 = vmatpush1.bf16.msra.mxu0 0
        %1107 = vmatprep.subr.bf16.mxu0 0
        %1108 = vmatpush1.bf16.msra.mxu0 0
        %1109 = vmatprep.subr.bf16.mxu0 0
        %1110 = vmatpush1.bf16.msra.mxu0 0
        %1111 = vmatprep.subr.bf16.mxu0 0
        %1112 = vmatpush1.bf16.msra.mxu0 0
        %1113 = vmatprep.mubr.bf16.mxu0 0
        %1114 = vmatmul.mubr.bf16.gmra.mrb[0].mxu0 %v923
        %v1115 = vpop.f32.mrb[0].mxu0
        %v1116 = vadd.f32 %v905, %v1115
        %v1117 = vpop.f32.mrb[0].mxu0
        %v1118 = vpop.f32.mrb[0].mxu0
        %v1119 = vpop.f32.mrb[0].mxu0
        %1120 = vdwg.mxu0
        %v1121 = vld [vmem:[%s777] sm:$0xf]
        %v1122 = vld [vmem:[%s777 + $0x4] sm:$0xf]
        %v1123 = vld [vmem:[%s777 + $0x8] sm:$0xf]
        %v1124 = vld [vmem:[%s777 + $0xc] sm:$0xf]
        %v1125 = vld [vmem:[%s777 + $0x10] sm:$0xf]
        %v1126 = vld [vmem:[%s777 + $0x14] sm:$0xf]
        %v1127 = vld [vmem:[%s777 + $0x18] sm:$0xf]
        %v1128 = vld [vmem:[%s777 + $0x1c] sm:$0xf]
        %v1129 = vld [vmem:[%s777 + $0x20] sm:$0xf]
        %v1130 = vld [vmem:[%s777 + $0x24] sm:$0xf]
        %v1131 = vld [vmem:[%s777 + $0x28] sm:$0xf]
        %v1132 = vld [vmem:[%s777 + $0x2c] sm:$0xf]
        %v1133 = vld [vmem:[%s777 + $0x30] sm:$0xf]
        %v1134 = vld [vmem:[%s777 + $0x34] sm:$0xf]
        %v1135 = vld [vmem:[%s777 + $0x38] sm:$0xf]
        %v1136 = vld [vmem:[%s777 + $0x3c] sm:$0xf]
        %v1137 = vld [vmem:[%s790] sm:$0x1]
        %v1138 = vld [vmem:[%s790 + $0x1] sm:$0x1]
        %v1139 = vld [vmem:[%s790 + $0x2] sm:$0x1]
        %v1140 = vld [vmem:[%s790 + $0x3] sm:$0x1]
        %v1145 = vlaneseq
        %v1146 = vshrl.u32 %v1145, 7
        %v1147 = vsub.s32 0, %v1146
        %v1148 = vrot.slane %v1137, %v1147
        %v1149 = vlaneseq
        %v1150 = vshrl.u32 %v1149, 7
        %v1151 = vsub.s32 0, %v1150
        %v1152 = vrot.slane %v1138, %v1151
        %v1153 = vlaneseq
        %v1154 = vshrl.u32 %v1153, 7
        %v1155 = vsub.s32 0, %v1154
        %v1156 = vrot.slane %v1139, %v1155
        %v1157 = vlaneseq
        %v1158 = vshrl.u32 %v1157, 7
        %v1159 = vsub.s32 0, %v1158
        %v1160 = vrot.slane %v1140, %v1159
        %v1169 = vunpack.c.l.b16 %v1121
        %v1170 = vunpack.c.l.b16 %v1122
        %v1171 = vunpack.c.l.b16 %v1123
        %v1172 = vunpack.c.l.b16 %v1124
        %v1173 = vpack.c.b16 %v1170, %v1169
        %v1174 = vpack.c.b16 %v1172, %v1171
        %1177 = vmatprep.subr.bf16.mxu0 0
        %1178 = vmatpush1.bf16.msra.mxu0 %v1173
        %1179 = vmatprep.subr.bf16.mxu0 0
        %1180 = vmatpush1.bf16.msra.mxu0 %v1174
        %1181 = vmatprep.subr.bf16.mxu0 0
        %1182 = vmatpush1.bf16.msra.mxu0 0
        %1183 = vmatprep.subr.bf16.mxu0 0
        %1184 = vmatpush1.bf16.msra.mxu0 0
        %1185 = vmatprep.subr.bf16.mxu0 0
        %1186 = vmatpush1.bf16.msra.mxu0 0
        %1187 = vmatprep.subr.bf16.mxu0 0
        %1188 = vmatpush1.bf16.msra.mxu0 0
        %1189 = vmatprep.subr.bf16.mxu0 0
        %1190 = vmatpush1.bf16.msra.mxu0 0
        %1191 = vmatprep.subr.bf16.mxu0 0
        %1192 = vmatpush1.bf16.msra.mxu0 0
        %1193 = vmatprep.subr.bf16.mxu0 0
        %1194 = vmatpush1.bf16.msra.mxu0 0
        %1195 = vmatprep.subr.bf16.mxu0 0
        %1196 = vmatpush1.bf16.msra.mxu0 0
        %1197 = vmatprep.subr.bf16.mxu0 0
        %1198 = vmatpush1.bf16.msra.mxu0 0
        %1199 = vmatprep.subr.bf16.mxu0 0
        %1200 = vmatpush1.bf16.msra.mxu0 0
        %1201 = vmatprep.subr.bf16.mxu0 0
        %1202 = vmatpush1.bf16.msra.mxu0 0
        %1203 = vmatprep.subr.bf16.mxu0 0
        %1204 = vmatpush1.bf16.msra.mxu0 0
        %1205 = vmatprep.subr.bf16.mxu0 0
        %1206 = vmatpush1.bf16.msra.mxu0 0
        %1207 = vmatprep.subr.bf16.mxu0 0
        %1208 = vmatpush1.bf16.msra.mxu0 0
        %1209 = vmatprep.mubr.bf16.mxu0 0
        %1210 = vmatmul.mubr.bf16.gmra.mrb[0].mxu0 %v923
        %v1211 = vpop.f32.mrb[0].mxu0
        %v1212 = vadd.f32 %v1148, %v1211
        %v1213 = vpop.f32.mrb[0].mxu0
        %v1214 = vpop.f32.mrb[0].mxu0
        %v1215 = vpop.f32.mrb[0].mxu0
        %1216 = vdwg.mxu0
        %v1221 = vunpack.c.l.b16 %v1125
        %v1222 = vunpack.c.l.b16 %v1126
        %v1223 = vunpack.c.l.b16 %v1127
        %v1224 = vunpack.c.l.b16 %v1128
        %v1225 = vpack.c.b16 %v1222, %v1221
        %v1226 = vpack.c.b16 %v1224, %v1223
        %1229 = vmatprep.subr.bf16.mxu0 0
        %1230 = vmatpush1.bf16.msra.mxu0 %v1225
        %1231 = vmatprep.subr.bf16.mxu0 0
        %1232 = vmatpush1.bf16.msra.mxu0 %v1226
        %1233 = vmatprep.subr.bf16.mxu0 0
        %1234 = vmatpush1.bf16.msra.mxu0 0
        %1235 = vmatprep.subr.bf16.mxu0 0
        %1236 = vmatpush1.bf16.msra.mxu0 0
        %1237 = vmatprep.subr.bf16.mxu0 0
        %1238 = vmatpush1.bf16.msra.mxu0 0
        %1239 = vmatprep.subr.bf16.mxu0 0
        %1240 = vmatpush1.bf16.msra.mxu0 0
        %1241 = vmatprep.subr.bf16.mxu0 0
        %1242 = vmatpush1.bf16.msra.mxu0 0
        %1243 = vmatprep.subr.bf16.mxu0 0
        %1244 = vmatpush1.bf16.msra.mxu0 0
        %1245 = vmatprep.subr.bf16.mxu0 0
        %1246 = vmatpush1.bf16.msra.mxu0 0
        %1247 = vmatprep.subr.bf16.mxu0 0
        %1248 = vmatpush1.bf16.msra.mxu0 0
        %1249 = vmatprep.subr.bf16.mxu0 0
        %1250 = vmatpush1.bf16.msra.mxu0 0
        %1251 = vmatprep.subr.bf16.mxu0 0
        %1252 = vmatpush1.bf16.msra.mxu0 0
        %1253 = vmatprep.subr.bf16.mxu0 0
        %1254 = vmatpush1.bf16.msra.mxu0 0
        %1255 = vmatprep.subr.bf16.mxu0 0
        %1256 = vmatpush1.bf16.msra.mxu0 0
        %1257 = vmatprep.subr.bf16.mxu0 0
        %1258 = vmatpush1.bf16.msra.mxu0 0
        %1259 = vmatprep.subr.bf16.mxu0 0
        %1260 = vmatpush1.bf16.msra.mxu0 0
        %1261 = vmatprep.mubr.bf16.mxu0 0
        %1262 = vmatmul.mubr.bf16.gmra.mrb[0].mxu0 %v923
        %v1263 = vpop.f32.mrb[0].mxu0
        %v1264 = vadd.f32 %v1152, %v1263
        %v1265 = vpop.f32.mrb[0].mxu0
        %v1266 = vpop.f32.mrb[0].mxu0
        %v1267 = vpop.f32.mrb[0].mxu0
        %1268 = vdwg.mxu0
        %v1273 = vunpack.c.l.b16 %v1129
        %v1274 = vunpack.c.l.b16 %v1130
        %v1275 = vunpack.c.l.b16 %v1131
        %v1276 = vunpack.c.l.b16 %v1132
        %v1277 = vpack.c.b16 %v1274, %v1273
        %v1278 = vpack.c.b16 %v1276, %v1275
        %1281 = vmatprep.subr.bf16.mxu0 0
        %1282 = vmatpush1.bf16.msra.mxu0 %v1277
        %1283 = vmatprep.subr.bf16.mxu0 0
        %1284 = vmatpush1.bf16.msra.mxu0 %v1278
        %1285 = vmatprep.subr.bf16.mxu0 0
        %1286 = vmatpush1.bf16.msra.mxu0 0
        %1287 = vmatprep.subr.bf16.mxu0 0
        %1288 = vmatpush1.bf16.msra.mxu0 0
        %1289 = vmatprep.subr.bf16.mxu0 0
        %1290 = vmatpush1.bf16.msra.mxu0 0
        %1291 = vmatprep.subr.bf16.mxu0 0
        %1292 = vmatpush1.bf16.msra.mxu0 0
        %1293 = vmatprep.subr.bf16.mxu0 0
        %1294 = vmatpush1.bf16.msra.mxu0 0
        %1295 = vmatprep.subr.bf16.mxu0 0
        %1296 = vmatpush1.bf16.msra.mxu0 0
        %1297 = vmatprep.subr.bf16.mxu0 0
        %1298 = vmatpush1.bf16.msra.mxu0 0
        %1299 = vmatprep.subr.bf16.mxu0 0
        %1300 = vmatpush1.bf16.msra.mxu0 0
        %1301 = vmatprep.subr.bf16.mxu0 0
        %1302 = vmatpush1.bf16.msra.mxu0 0
        %1303 = vmatprep.subr.bf16.mxu0 0
        %1304 = vmatpush1.bf16.msra.mxu0 0
        %1305 = vmatprep.subr.bf16.mxu0 0
        %1306 = vmatpush1.bf16.msra.mxu0 0
        %1307 = vmatprep.subr.bf16.mxu0 0
        %1308 = vmatpush1.bf16.msra.mxu0 0
        %1309 = vmatprep.subr.bf16.mxu0 0
        %1310 = vmatpush1.bf16.msra.mxu0 0
        %1311 = vmatprep.subr.bf16.mxu0 0
        %1312 = vmatpush1.bf16.msra.mxu0 0
        %1313 = vmatprep.mubr.bf16.mxu0 0
        %1314 = vmatmul.mubr.bf16.gmra.mrb[0].mxu0 %v923
        %v1315 = vpop.f32.mrb[0].mxu0
        %v1316 = vadd.f32 %v1156, %v1315
        %v1317 = vpop.f32.mrb[0].mxu0
        %v1318 = vpop.f32.mrb[0].mxu0
        %v1319 = vpop.f32.mrb[0].mxu0
        %1320 = vdwg.mxu0
        %v1325 = vunpack.c.l.b16 %v1133
        %v1326 = vunpack.c.l.b16 %v1134
        %v1327 = vunpack.c.l.b16 %v1135
        %v1328 = vunpack.c.l.b16 %v1136
        %v1329 = vpack.c.b16 %v1326, %v1325
        %v1330 = vpack.c.b16 %v1328, %v1327
        %1333 = vmatprep.subr.bf16.mxu0 0
        %1334 = vmatpush1.bf16.msra.mxu0 %v1329
        %1335 = vmatprep.subr.bf16.mxu0 0
        %1336 = vmatpush1.bf16.msra.mxu0 %v1330
        %1337 = vmatprep.subr.bf16.mxu0 0
        %1338 = vmatpush1.bf16.msra.mxu0 0
        %1339 = vmatprep.subr.bf16.mxu0 0
        %1340 = vmatpush1.bf16.msra.mxu0 0
        %1341 = vmatprep.subr.bf16.mxu0 0
        %1342 = vmatpush1.bf16.msra.mxu0 0
        %1343 = vmatprep.subr.bf16.mxu0 0
        %1344 = vmatpush1.bf16.msra.mxu0 0
        %1345 = vmatprep.subr.bf16.mxu0 0
        %1346 = vmatpush1.bf16.msra.mxu0 0
        %1347 = vmatprep.subr.bf16.mxu0 0
        %1348 = vmatpush1.bf16.msra.mxu0 0
        %1349 = vmatprep.subr.bf16.mxu0 0
        %1350 = vmatpush1.bf16.msra.mxu0 0
        %1351 = vmatprep.subr.bf16.mxu0 0
        %1352 = vmatpush1.bf16.msra.mxu0 0
        %1353 = vmatprep.subr.bf16.mxu0 0
        %1354 = vmatpush1.bf16.msra.mxu0 0
        %1355 = vmatprep.subr.bf16.mxu0 0
        %1356 = vmatpush1.bf16.msra.mxu0 0
        %1357 = vmatprep.subr.bf16.mxu0 0
        %1358 = vmatpush1.bf16.msra.mxu0 0
        %1359 = vmatprep.subr.bf16.mxu0 0
        %1360 = vmatpush1.bf16.msra.mxu0 0
        %1361 = vmatprep.subr.bf16.mxu0 0
        %1362 = vmatpush1.bf16.msra.mxu0 0
        %1363 = vmatprep.subr.bf16.mxu0 0
        %1364 = vmatpush1.bf16.msra.mxu0 0
        %1365 = vmatprep.mubr.bf16.mxu0 0
        %1366 = vmatmul.mubr.bf16.gmra.mrb[0].mxu0 %v923
        %v1367 = vpop.f32.mrb[0].mxu0
        %v1368 = vadd.f32 %v1160, %v1367
        %v1369 = vpop.f32.mrb[0].mxu0
        %v1370 = vpop.f32.mrb[0].mxu0
        %v1371 = vpop.f32.mrb[0].mxu0
        %1372 = vdwg.mxu0
        %v1373 = vld [vmem:[%s782] sm:$0xf]
        %v1374 = vld [vmem:[%s782 + $0x4] sm:$0xf]
        %v1375 = vld [vmem:[%s782 + $0x8] sm:$0xf]
        %v1376 = vld [vmem:[%s782 + $0xc] sm:$0xf]
        %v1377 = vld [vmem:[%s782 + $0x10] sm:$0xf]
        %v1378 = vld [vmem:[%s782 + $0x14] sm:$0xf]
        %v1379 = vld [vmem:[%s782 + $0x18] sm:$0xf]
        %v1380 = vld [vmem:[%s782 + $0x1c] sm:$0xf]
        %v1381 = vld [vmem:[%s782 + $0x20] sm:$0xf]
        %v1382 = vld [vmem:[%s782 + $0x24] sm:$0xf]
        %v1383 = vld [vmem:[%s782 + $0x28] sm:$0xf]
        %v1384 = vld [vmem:[%s782 + $0x2c] sm:$0xf]
        %v1385 = vld [vmem:[%s782 + $0x30] sm:$0xf]
        %v1386 = vld [vmem:[%s782 + $0x34] sm:$0xf]
        %v1387 = vld [vmem:[%s782 + $0x38] sm:$0xf]
        %v1388 = vld [vmem:[%s782 + $0x3c] sm:$0xf]
        %v1389 = vld [vmem:[%s794] sm:$0x1]
        %v1390 = vld [vmem:[%s794 + $0x1] sm:$0x1]
        %v1391 = vld [vmem:[%s794 + $0x2] sm:$0x1]
        %v1392 = vld [vmem:[%s794 + $0x3] sm:$0x1]
        %v1397 = vlaneseq
        %v1398 = vshrl.u32 %v1397, 7
        %v1399 = vsub.s32 0, %v1398
        %v1400 = vrot.slane %v1389, %v1399
        %v1401 = vlaneseq
        %v1402 = vshrl.u32 %v1401, 7
        %v1403 = vsub.s32 0, %v1402
        %v1404 = vrot.slane %v1390, %v1403
        %v1405 = vlaneseq
        %v1406 = vshrl.u32 %v1405, 7
        %v1407 = vsub.s32 0, %v1406
        %v1408 = vrot.slane %v1391, %v1407
        %v1409 = vlaneseq
        %v1410 = vshrl.u32 %v1409, 7
        %v1411 = vsub.s32 0, %v1410
        %v1412 = vrot.slane %v1392, %v1411
        %v1421 = vunpack.c.l.b16 %v1373
        %v1422 = vunpack.c.l.b16 %v1374
        %v1423 = vunpack.c.l.b16 %v1375
        %v1424 = vunpack.c.l.b16 %v1376
        %v1425 = vpack.c.b16 %v1422, %v1421
        %v1426 = vpack.c.b16 %v1424, %v1423
        %1429 = vmatprep.subr.bf16.mxu0 0
        %1430 = vmatpush1.bf16.msra.mxu0 %v1425
        %1431 = vmatprep.subr.bf16.mxu0 0
        %1432 = vmatpush1.bf16.msra.mxu0 %v1426
        %1433 = vmatprep.subr.bf16.mxu0 0
        %1434 = vmatpush1.bf16.msra.mxu0 0
        %1435 = vmatprep.subr.bf16.mxu0 0
        %1436 = vmatpush1.bf16.msra.mxu0 0
        %1437 = vmatprep.subr.bf16.mxu0 0
        %1438 = vmatpush1.bf16.msra.mxu0 0
        %1439 = vmatprep.subr.bf16.mxu0 0
        %1440 = vmatpush1.bf16.msra.mxu0 0
        %1441 = vmatprep.subr.bf16.mxu0 0
        %1442 = vmatpush1.bf16.msra.mxu0 0
        %1443 = vmatprep.subr.bf16.mxu0 0
        %1444 = vmatpush1.bf16.msra.mxu0 0
        %1445 = vmatprep.subr.bf16.mxu0 0
        %1446 = vmatpush1.bf16.msra.mxu0 0
        %1447 = vmatprep.subr.bf16.mxu0 0
        %1448 = vmatpush1.bf16.msra.mxu0 0
        %1449 = vmatprep.subr.bf16.mxu0 0
        %1450 = vmatpush1.bf16.msra.mxu0 0
        %1451 = vmatprep.subr.bf16.mxu0 0
        %1452 = vmatpush1.bf16.msra.mxu0 0
        %1453 = vmatprep.subr.bf16.mxu0 0
        %1454 = vmatpush1.bf16.msra.mxu0 0
        %1455 = vmatprep.subr.bf16.mxu0 0
        %1456 = vmatpush1.bf16.msra.mxu0 0
        %1457 = vmatprep.subr.bf16.mxu0 0
        %1458 = vmatpush1.bf16.msra.mxu0 0
        %1459 = vmatprep.subr.bf16.mxu0 0
        %1460 = vmatpush1.bf16.msra.mxu0 0
        %1461 = vmatprep.mubr.bf16.mxu0 0
        %1462 = vmatmul.mubr.bf16.gmra.mrb[0].mxu0 %v923
        %v1463 = vpop.f32.mrb[0].mxu0
        %v1464 = vadd.f32 %v1400, %v1463
        %v1465 = vpop.f32.mrb[0].mxu0
        %v1466 = vpop.f32.mrb[0].mxu0
        %v1467 = vpop.f32.mrb[0].mxu0
        %1468 = vdwg.mxu0
        %v1473 = vunpack.c.l.b16 %v1377
        %v1474 = vunpack.c.l.b16 %v1378
        %v1475 = vunpack.c.l.b16 %v1379
        %v1476 = vunpack.c.l.b16 %v1380
        %v1477 = vpack.c.b16 %v1474, %v1473
        %v1478 = vpack.c.b16 %v1476, %v1475
        %1481 = vmatprep.subr.bf16.mxu0 0
        %1482 = vmatpush1.bf16.msra.mxu0 %v1477
        %1483 = vmatprep.subr.bf16.mxu0 0
        %1484 = vmatpush1.bf16.msra.mxu0 %v1478
        %1485 = vmatprep.subr.bf16.mxu0 0
        %1486 = vmatpush1.bf16.msra.mxu0 0
        %1487 = vmatprep.subr.bf16.mxu0 0
        %1488 = vmatpush1.bf16.msra.mxu0 0
        %1489 = vmatprep.subr.bf16.mxu0 0
        %1490 = vmatpush1.bf16.msra.mxu0 0
        %1491 = vmatprep.subr.bf16.mxu0 0
        %1492 = vmatpush1.bf16.msra.mxu0 0
        %1493 = vmatprep.subr.bf16.mxu0 0
        %1494 = vmatpush1.bf16.msra.mxu0 0
        %1495 = vmatprep.subr.bf16.mxu0 0
        %1496 = vmatpush1.bf16.msra.mxu0 0
        %1497 = vmatprep.subr.bf16.mxu0 0
        %1498 = vmatpush1.bf16.msra.mxu0 0
        %1499 = vmatprep.subr.bf16.mxu0 0
        %1500 = vmatpush1.bf16.msra.mxu0 0
        %1501 = vmatprep.subr.bf16.mxu0 0
        %1502 = vmatpush1.bf16.msra.mxu0 0
        %1503 = vmatprep.subr.bf16.mxu0 0
        %1504 = vmatpush1.bf16.msra.mxu0 0
        %1505 = vmatprep.subr.bf16.mxu0 0
        %1506 = vmatpush1.bf16.msra.mxu0 0
        %1507 = vmatprep.subr.bf16.mxu0 0
        %1508 = vmatpush1.bf16.msra.mxu0 0
        %1509 = vmatprep.subr.bf16.mxu0 0
        %1510 = vmatpush1.bf16.msra.mxu0 0
        %1511 = vmatprep.subr.bf16.mxu0 0
        %1512 = vmatpush1.bf16.msra.mxu0 0
        %1513 = vmatprep.mubr.bf16.mxu0 0
        %1514 = vmatmul.mubr.bf16.gmra.mrb[0].mxu0 %v923
        %v1515 = vpop.f32.mrb[0].mxu0
        %v1516 = vadd.f32 %v1404, %v1515
        %v1517 = vpop.f32.mrb[0].mxu0
        %v1518 = vpop.f32.mrb[0].mxu0
        %v1519 = vpop.f32.mrb[0].mxu0
        %1520 = vdwg.mxu0
        %v1525 = vunpack.c.l.b16 %v1381
        %v1526 = vunpack.c.l.b16 %v1382
        %v1527 = vunpack.c.l.b16 %v1383
        %v1528 = vunpack.c.l.b16 %v1384
        %v1529 = vpack.c.b16 %v1526, %v1525
        %v1530 = vpack.c.b16 %v1528, %v1527
        %1533 = vmatprep.subr.bf16.mxu0 0
        %1534 = vmatpush1.bf16.msra.mxu0 %v1529
        %1535 = vmatprep.subr.bf16.mxu0 0
        %1536 = vmatpush1.bf16.msra.mxu0 %v1530
        %1537 = vmatprep.subr.bf16.mxu0 0
        %1538 = vmatpush1.bf16.msra.mxu0 0
        %1539 = vmatprep.subr.bf16.mxu0 0
        %1540 = vmatpush1.bf16.msra.mxu0 0
        %1541 = vmatprep.subr.bf16.mxu0 0
        %1542 = vmatpush1.bf16.msra.mxu0 0
        %1543 = vmatprep.subr.bf16.mxu0 0
        %1544 = vmatpush1.bf16.msra.mxu0 0
        %1545 = vmatprep.subr.bf16.mxu0 0
        %1546 = vmatpush1.bf16.msra.mxu0 0
        %1547 = vmatprep.subr.bf16.mxu0 0
        %1548 = vmatpush1.bf16.msra.mxu0 0
        %1549 = vmatprep.subr.bf16.mxu0 0
        %1550 = vmatpush1.bf16.msra.mxu0 0
        %1551 = vmatprep.subr.bf16.mxu0 0
        %1552 = vmatpush1.bf16.msra.mxu0 0
        %1553 = vmatprep.subr.bf16.mxu0 0
        %1554 = vmatpush1.bf16.msra.mxu0 0
        %1555 = vmatprep.subr.bf16.mxu0 0
        %1556 = vmatpush1.bf16.msra.mxu0 0
        %1557 = vmatprep.subr.bf16.mxu0 0
        %1558 = vmatpush1.bf16.msra.mxu0 0
        %1559 = vmatprep.subr.bf16.mxu0 0
        %1560 = vmatpush1.bf16.msra.mxu0 0
        %1561 = vmatprep.subr.bf16.mxu0 0
        %1562 = vmatpush1.bf16.msra.mxu0 0
        %1563 = vmatprep.subr.bf16.mxu0 0
        %1564 = vmatpush1.bf16.msra.mxu0 0
        %1565 = vmatprep.mubr.bf16.mxu0 0
        %1566 = vmatmul.mubr.bf16.gmra.mrb[0].mxu0 %v923
        %v1567 = vpop.f32.mrb[0].mxu0
        %v1568 = vadd.f32 %v1408, %v1567
        %v1569 = vpop.f32.mrb[0].mxu0
        %v1570 = vpop.f32.mrb[0].mxu0
        %v1571 = vpop.f32.mrb[0].mxu0
        %1572 = vdwg.mxu0
        %v1577 = vunpack.c.l.b16 %v1385
        %v1578 = vunpack.c.l.b16 %v1386
        %v1579 = vunpack.c.l.b16 %v1387
        %v1580 = vunpack.c.l.b16 %v1388
        %v1581 = vpack.c.b16 %v1578, %v1577
        %v1582 = vpack.c.b16 %v1580, %v1579
        %1585 = vmatprep.subr.bf16.mxu0 0
        %1586 = vmatpush1.bf16.msra.mxu0 %v1581
        %1587 = vmatprep.subr.bf16.mxu0 0
        %1588 = vmatpush1.bf16.msra.mxu0 %v1582
        %1589 = vmatprep.subr.bf16.mxu0 0
        %1590 = vmatpush1.bf16.msra.mxu0 0
        %1591 = vmatprep.subr.bf16.mxu0 0
        %1592 = vmatpush1.bf16.msra.mxu0 0
        %1593 = vmatprep.subr.bf16.mxu0 0
        %1594 = vmatpush1.bf16.msra.mxu0 0
        %1595 = vmatprep.subr.bf16.mxu0 0
        %1596 = vmatpush1.bf16.msra.mxu0 0
        %1597 = vmatprep.subr.bf16.mxu0 0
        %1598 = vmatpush1.bf16.msra.mxu0 0
        %1599 = vmatprep.subr.bf16.mxu0 0
        %1600 = vmatpush1.bf16.msra.mxu0 0
        %1601 = vmatprep.subr.bf16.mxu0 0
        %1602 = vmatpush1.bf16.msra.mxu0 0
        %1603 = vmatprep.subr.bf16.mxu0 0
        %1604 = vmatpush1.bf16.msra.mxu0 0
        %1605 = vmatprep.subr.bf16.mxu0 0
        %1606 = vmatpush1.bf16.msra.mxu0 0
        %1607 = vmatprep.subr.bf16.mxu0 0
        %1608 = vmatpush1.bf16.msra.mxu0 0
        %1609 = vmatprep.subr.bf16.mxu0 0
        %1610 = vmatpush1.bf16.msra.mxu0 0
        %1611 = vmatprep.subr.bf16.mxu0 0
        %1612 = vmatpush1.bf16.msra.mxu0 0
        %1613 = vmatprep.subr.bf16.mxu0 0
        %1614 = vmatpush1.bf16.msra.mxu0 0
        %1615 = vmatprep.subr.bf16.mxu0 0
        %1616 = vmatpush1.bf16.msra.mxu0 0
        %1617 = vmatprep.mubr.bf16.mxu0 0
        %1618 = vmatmul.mubr.bf16.gmra.mrb[0].mxu0 %v923
        %v1619 = vpop.f32.mrb[0].mxu0
        %v1620 = vadd.f32 %v1412, %v1619
        %v1621 = vpop.f32.mrb[0].mxu0
        %v1622 = vpop.f32.mrb[0].mxu0
        %v1623 = vpop.f32.mrb[0].mxu0
        %1624 = vdwg.mxu0
        %v1625 = vlaneseq
        %v1626 = vshrl.u32 %v1625, 7
        %v1627 = vlaneseq
        %v1628 = vand.u32 %v1627, 127
        %vm1629 = vcmp.le.s32.totalorder %v1628, %v1626
        %v1630 = vpack.c.bf16 %v960, %v960
        %v1631 = vpack.c.bf16 %v1012, %v1012
        %v1632 = vpack.c.bf16 %v1064, %v1064
        %v1633 = vpack.c.bf16 %v1116, %v1116
        %v1634 = vpack.c.bf16 %v1212, %v1212
        %v1635 = vpack.c.bf16 %v1264, %v1264
        %v1636 = vpack.c.bf16 %v1316, %v1316
        %v1637 = vpack.c.bf16 %v1368, %v1368
        %vm1638 = vcmask 64512
        %v1640 = vsel %vm1638, %v1630, 0
        %v1643 = vsel %vm1638, %v1634, 0
        %1645 = vmatprep.subr.bf16.mxu0 0
        %1646 = vmatpush1.bf16.xpose.msra.mxu0 %v1643
        %1647 = vmatprep.subr.bf16.mxu0 0
        %1648 = vmatpush1.bf16.xpose.msra.mxu0 0
        %1649 = vmatprep.subr.bf16.mxu0 0
        %1650 = vmatpush1.bf16.xpose.msra.mxu0 0
        %1651 = vmatprep.subr.bf16.mxu0 0
        %1652 = vmatpush1.bf16.xpose.msra.mxu0 0
        %1653 = vmatprep.subr.bf16.mxu0 0
        %1654 = vmatpush1.bf16.xpose.msra.mxu0 0
        %1655 = vmatprep.subr.bf16.mxu0 0
        %1656 = vmatpush1.bf16.xpose.msra.mxu0 0
        %1657 = vmatprep.subr.bf16.mxu0 0
        %1658 = vmatpush1.bf16.xpose.msra.mxu0 0
        %1659 = vmatprep.subr.bf16.mxu0 0
        %1660 = vmatpush1.bf16.xpose.msra.mxu0 0
        %1661 = vmatprep.subr.bf16.mxu0 0
        %1662 = vmatpush1.bf16.xpose.msra.mxu0 0
        %1663 = vmatprep.subr.bf16.mxu0 0
        %1664 = vmatpush1.bf16.xpose.msra.mxu0 0
        %1665 = vmatprep.subr.bf16.mxu0 0
        %1666 = vmatpush1.bf16.xpose.msra.mxu0 0
        %1667 = vmatprep.subr.bf16.mxu0 0
        %1668 = vmatpush1.bf16.xpose.msra.mxu0 0
        %1669 = vmatprep.subr.bf16.mxu0 0
        %1670 = vmatpush1.bf16.xpose.msra.mxu0 0
        %1671 = vmatprep.subr.bf16.mxu0 0
        %1672 = vmatpush1.bf16.xpose.msra.mxu0 0
        %1673 = vmatprep.subr.bf16.mxu0 0
        %1674 = vmatpush1.bf16.xpose.msra.mxu0 0
        %1675 = vmatprep.subr.bf16.mxu0 0
        %1676 = vmatpush1.bf16.xpose.msra.mxu0 0
        %1677 = vmatprep.mubr.bf16.mxu0 0
        %1678 = vmatmul.mubr.bf16.gmra.mrb[0].mxu0 %v1640
        %v1679 = vpop.f32.mrb[0].mxu0
        %v1680 = vadd.f32 0.0, %v1679
        %v1681 = vpop.f32.mrb[0].mxu0
        %v1682 = vpop.f32.mrb[0].mxu0
        %v1683 = vpop.f32.mrb[0].mxu0
        %1684 = vdwg.mxu0
        %v1686 = vsel %vm1638, %v1631, 0
        %v1689 = vsel %vm1638, %v1635, 0
        %1691 = vmatprep.subr.bf16.mxu0 0
        %1692 = vmatpush1.bf16.xpose.msra.mxu0 %v1689
        %1693 = vmatprep.subr.bf16.mxu0 0
        %1694 = vmatpush1.bf16.xpose.msra.mxu0 0
        %1695 = vmatprep.subr.bf16.mxu0 0
        %1696 = vmatpush1.bf16.xpose.msra.mxu0 0
        %1697 = vmatprep.subr.bf16.mxu0 0
        %1698 = vmatpush1.bf16.xpose.msra.mxu0 0
        %1699 = vmatprep.subr.bf16.mxu0 0
        %1700 = vmatpush1.bf16.xpose.msra.mxu0 0
        %1701 = vmatprep.subr.bf16.mxu0 0
        %1702 = vmatpush1.bf16.xpose.msra.mxu0 0
        %1703 = vmatprep.subr.bf16.mxu0 0
        %1704 = vmatpush1.bf16.xpose.msra.mxu0 0
        %1705 = vmatprep.subr.bf16.mxu0 0
        %1706 = vmatpush1.bf16.xpose.msra.mxu0 0
        %1707 = vmatprep.subr.bf16.mxu0 0
        %1708 = vmatpush1.bf16.xpose.msra.mxu0 0
        %1709 = vmatprep.subr.bf16.mxu0 0
        %1710 = vmatpush1.bf16.xpose.msra.mxu0 0
        %1711 = vmatprep.subr.bf16.mxu0 0
        %1712 = vmatpush1.bf16.xpose.msra.mxu0 0
        %1713 = vmatprep.subr.bf16.mxu0 0
        %1714 = vmatpush1.bf16.xpose.msra.mxu0 0
        %1715 = vmatprep.subr.bf16.mxu0 0
        %1716 = vmatpush1.bf16.xpose.msra.mxu0 0
        %1717 = vmatprep.subr.bf16.mxu0 0
        %1718 = vmatpush1.bf16.xpose.msra.mxu0 0
        %1719 = vmatprep.subr.bf16.mxu0 0
        %1720 = vmatpush1.bf16.xpose.msra.mxu0 0
        %1721 = vmatprep.subr.bf16.mxu0 0
        %1722 = vmatpush1.bf16.xpose.msra.mxu0 0
        %1723 = vmatprep.mubr.bf16.mxu0 0
        %1724 = vmatmul.mubr.bf16.gmra.mrb[0].mxu0 %v1686
        %v1725 = vpop.f32.mrb[0].mxu0
        %v1726 = vadd.f32 0.0, %v1725
        %v1727 = vpop.f32.mrb[0].mxu0
        %v1728 = vpop.f32.mrb[0].mxu0
        %v1729 = vpop.f32.mrb[0].mxu0
        %1730 = vdwg.mxu0
        %v1732 = vsel %vm1638, %v1632, 0
        %v1735 = vsel %vm1638, %v1636, 0
        %1737 = vmatprep.subr.bf16.mxu0 0
        %1738 = vmatpush1.bf16.xpose.msra.mxu0 %v1735
        %1739 = vmatprep.subr.bf16.mxu0 0
        %1740 = vmatpush1.bf16.xpose.msra.mxu0 0
        %1741 = vmatprep.subr.bf16.mxu0 0
        %1742 = vmatpush1.bf16.xpose.msra.mxu0 0
        %1743 = vmatprep.subr.bf16.mxu0 0
        %1744 = vmatpush1.bf16.xpose.msra.mxu0 0
        %1745 = vmatprep.subr.bf16.mxu0 0
        %1746 = vmatpush1.bf16.xpose.msra.mxu0 0
        %1747 = vmatprep.subr.bf16.mxu0 0
        %1748 = vmatpush1.bf16.xpose.msra.mxu0 0
        %1749 = vmatprep.subr.bf16.mxu0 0
        %1750 = vmatpush1.bf16.xpose.msra.mxu0 0
        %1751 = vmatprep.subr.bf16.mxu0 0
        %1752 = vmatpush1.bf16.xpose.msra.mxu0 0
        %1753 = vmatprep.subr.bf16.mxu0 0
        %1754 = vmatpush1.bf16.xpose.msra.mxu0 0
        %1755 = vmatprep.subr.bf16.mxu0 0
        %1756 = vmatpush1.bf16.xpose.msra.mxu0 0
        %1757 = vmatprep.subr.bf16.mxu0 0
        %1758 = vmatpush1.bf16.xpose.msra.mxu0 0
        %1759 = vmatprep.subr.bf16.mxu0 0
        %1760 = vmatpush1.bf16.xpose.msra.mxu0 0
        %1761 = vmatprep.subr.bf16.mxu0 0
        %1762 = vmatpush1.bf16.xpose.msra.mxu0 0
        %1763 = vmatprep.subr.bf16.mxu0 0
        %1764 = vmatpush1.bf16.xpose.msra.mxu0 0
        %1765 = vmatprep.subr.bf16.mxu0 0
        %1766 = vmatpush1.bf16.xpose.msra.mxu0 0
        %1767 = vmatprep.subr.bf16.mxu0 0
        %1768 = vmatpush1.bf16.xpose.msra.mxu0 0
        %1769 = vmatprep.mubr.bf16.mxu0 0
        %1770 = vmatmul.mubr.bf16.gmra.mrb[0].mxu0 %v1732
        %v1771 = vpop.f32.mrb[0].mxu0
        %v1772 = vadd.f32 0.0, %v1771
        %v1773 = vpop.f32.mrb[0].mxu0
        %v1774 = vpop.f32.mrb[0].mxu0
        %v1775 = vpop.f32.mrb[0].mxu0
        %1776 = vdwg.mxu0
        %v1778 = vsel %vm1638, %v1633, 0
        %v1781 = vsel %vm1638, %v1637, 0
        %1783 = vmatprep.subr.bf16.mxu0 0
        %1784 = vmatpush1.bf16.xpose.msra.mxu0 %v1781
        %1785 = vmatprep.subr.bf16.mxu0 0
        %1786 = vmatpush1.bf16.xpose.msra.mxu0 0
        %1787 = vmatprep.subr.bf16.mxu0 0
        %1788 = vmatpush1.bf16.xpose.msra.mxu0 0
        %1789 = vmatprep.subr.bf16.mxu0 0
        %1790 = vmatpush1.bf16.xpose.msra.mxu0 0
        %1791 = vmatprep.subr.bf16.mxu0 0
        %1792 = vmatpush1.bf16.xpose.msra.mxu0 0
        %1793 = vmatprep.subr.bf16.mxu0 0
        %1794 = vmatpush1.bf16.xpose.msra.mxu0 0
        %1795 = vmatprep.subr.bf16.mxu0 0
        %1796 = vmatpush1.bf16.xpose.msra.mxu0 0
        %1797 = vmatprep.subr.bf16.mxu0 0
        %1798 = vmatpush1.bf16.xpose.msra.mxu0 0
        %1799 = vmatprep.subr.bf16.mxu0 0
        %1800 = vmatpush1.bf16.xpose.msra.mxu0 0
        %1801 = vmatprep.subr.bf16.mxu0 0
        %1802 = vmatpush1.bf16.xpose.msra.mxu0 0
        %1803 = vmatprep.subr.bf16.mxu0 0
        %1804 = vmatpush1.bf16.xpose.msra.mxu0 0
        %1805 = vmatprep.subr.bf16.mxu0 0
        %1806 = vmatpush1.bf16.xpose.msra.mxu0 0
        %1807 = vmatprep.subr.bf16.mxu0 0
        %1808 = vmatpush1.bf16.xpose.msra.mxu0 0
        %1809 = vmatprep.subr.bf16.mxu0 0
        %1810 = vmatpush1.bf16.xpose.msra.mxu0 0
        %1811 = vmatprep.subr.bf16.mxu0 0
        %1812 = vmatpush1.bf16.xpose.msra.mxu0 0
        %1813 = vmatprep.subr.bf16.mxu0 0
        %1814 = vmatpush1.bf16.xpose.msra.mxu0 0
        %1815 = vmatprep.mubr.bf16.mxu0 0
        %1816 = vmatmul.mubr.bf16.gmra.mrb[0].mxu0 %v1778
        %v1817 = vpop.f32.mrb[0].mxu0
        %v1818 = vadd.f32 0.0, %v1817
        %v1819 = vpop.f32.mrb[0].mxu0
        %v1820 = vpop.f32.mrb[0].mxu0
        %v1821 = vpop.f32.mrb[0].mxu0
        %1822 = vdwg.mxu0
        %v1823 = vmul.f32 %v1680, 0.35355338
        %v1824 = vmul.f32 %v1726, 0.35355338
        %v1825 = vmul.f32 %v1772, 0.35355338
        %v1826 = vmul.f32 %v1818, 0.35355338
        %v1827 = vsel %vm1629, 1, 0
        %vm1828 = vcmp.eq.s32.totalorder %v1827, 1
        %v1829 = vsel %vm1828, %v1823, -1e+30
        %v1830 = vsel %vm1828, %v1824, -1e+30
        %v1831 = vsel %vm1828, %v1825, -1e+30
        %v1832 = vsel %vm1828, %v1826, -1e+30
        %v1833 = vsel %vm1638, %v1829, -inf
        %1834 = vmax.xlane.f32.xlu0 %v1833
        %v1835 = vpop.xlane.xlu0 %1834
        %v1836 = vsel %vm1638, %v1830, -inf
        %1837 = vmax.xlane.f32.xlu0 %v1836
        %v1838 = vpop.xlane.xlu0 %1837
        %v1839 = vsel %vm1638, %v1831, -inf
        %1840 = vmax.xlane.f32.xlu0 %v1839
        %v1841 = vpop.xlane.xlu0 %1840
        %v1842 = vsel %vm1638, %v1832, -inf
        %1843 = vmax.xlane.f32.xlu0 %v1842
        %v1844 = vpop.xlane.xlu0 %1843
        %v1845 = vsub.f32 %v1829, %v1835
        %v1846 = vsub.f32 %v1830, %v1838
        %v1847 = vsub.f32 %v1831, %v1841
        %v1848 = vsub.f32 %v1832, %v1844
        %v1849 = vmul.f32 %v1845, 1.442695
        %v1850 = vpow.pop %v1849
        %v1851 = vmul.f32 %v1846, 1.442695
        %v1852 = vpow.pop %v1851
        %v1853 = vmul.f32 %v1847, 1.442695
        %v1854 = vpow.pop %v1853
        %v1855 = vmul.f32 %v1848, 1.442695
        %v1856 = vpow.pop %v1855
        %v1857 = vsel %vm1638, %v1850, 0.0
        %1858 = vadd.xlane.f32.xlu0 %v1857
        %v1859 = vpop.xlane.xlu0 %1858
        %v1860 = vsel %vm1638, %v1852, 0.0
        %1861 = vadd.xlane.f32.xlu0 %v1860
        %v1862 = vpop.xlane.xlu0 %1861
        %v1863 = vsel %vm1638, %v1854, 0.0
        %1864 = vadd.xlane.f32.xlu0 %v1863
        %v1865 = vpop.xlane.xlu0 %1864
        %v1866 = vsel %vm1638, %v1856, 0.0
        %1867 = vadd.xlane.f32.xlu0 %v1866
        %v1868 = vpop.xlane.xlu0 %1867
        %v1869 = vrcp.pop %v1859
        %v1870 = vrcp.pop %v1862
        %v1871 = vrcp.pop %v1865
        %v1872 = vrcp.pop %v1868
        %v1873 = vmul.f32 %v1850, %v1869
        %v1874 = vmul.f32 %v1852, %v1870
        %v1875 = vmul.f32 %v1854, %v1871
        %v1876 = vmul.f32 %v1856, %v1872
        %v1877 = vpack.c.bf16 %v1873, %v1873
        %v1878 = vpack.c.bf16 %v1874, %v1874
        %v1879 = vpack.c.bf16 %v1875, %v1875
        %v1880 = vpack.c.bf16 %v1876, %v1876
        %v1881 = vpack.c.bf16 %v1464, %v1464
        %v1882 = vpack.c.bf16 %v1516, %v1516
        %v1883 = vpack.c.bf16 %v1568, %v1568
        %v1884 = vpack.c.bf16 %v1620, %v1620
        %v1886 = vsel %vm1638, %v1877, 0
        %vm1888 = vcmask 1043456
        %v1890 = vsel %vm1888, %v1881, 0
        %1892 = vmatprep.subr.bf16.mxu0 0
        %1893 = vmatpush1.bf16.msra.mxu0 %v1890
        %1894 = vmatprep.subr.bf16.mxu0 0
        %1895 = vmatpush1.bf16.msra.mxu0 0
        %1896 = vmatprep.subr.bf16.mxu0 0
        %1897 = vmatpush1.bf16.msra.mxu0 0
        %1898 = vmatprep.subr.bf16.mxu0 0
        %1899 = vmatpush1.bf16.msra.mxu0 0
        %1900 = vmatprep.subr.bf16.mxu0 0
        %1901 = vmatpush1.bf16.msra.mxu0 0
        %1902 = vmatprep.subr.bf16.mxu0 0
        %1903 = vmatpush1.bf16.msra.mxu0 0
        %1904 = vmatprep.subr.bf16.mxu0 0
        %1905 = vmatpush1.bf16.msra.mxu0 0
        %1906 = vmatprep.subr.bf16.mxu0 0
        %1907 = vmatpush1.bf16.msra.mxu0 0
        %1908 = vmatprep.subr.bf16.mxu0 0
        %1909 = vmatpush1.bf16.msra.mxu0 0
        %1910 = vmatprep.subr.bf16.mxu0 0
        %1911 = vmatpush1.bf16.msra.mxu0 0
        %1912 = vmatprep.subr.bf16.mxu0 0
        %1913 = vmatpush1.bf16.msra.mxu0 0
        %1914 = vmatprep.subr.bf16.mxu0 0
        %1915 = vmatpush1.bf16.msra.mxu0 0
        %1916 = vmatprep.subr.bf16.mxu0 0
        %1917 = vmatpush1.bf16.msra.mxu0 0
        %1918 = vmatprep.subr.bf16.mxu0 0
        %1919 = vmatpush1.bf16.msra.mxu0 0
        %1920 = vmatprep.subr.bf16.mxu0 0
        %1921 = vmatpush1.bf16.msra.mxu0 0
        %1922 = vmatprep.subr.bf16.mxu0 0
        %1923 = vmatpush1.bf16.msra.mxu0 0
        %1924 = vmatprep.mubr.bf16.mxu0 0
        %1925 = vmatmul.mubr.bf16.gmra.mrb[0].mxu0 %v1886
        %v1926 = vpop.f32.mrb[0].mxu0
        %v1927 = vadd.f32 0.0, %v1926
        %v1928 = vpop.f32.mrb[0].mxu0
        %v1929 = vpop.f32.mrb[0].mxu0
        %v1930 = vpop.f32.mrb[0].mxu0
        %1931 = vdwg.mxu0
        %v1933 = vsel %vm1638, %v1878, 0
        %v1936 = vsel %vm1888, %v1882, 0
        %1938 = vmatprep.subr.bf16.mxu0 0
        %1939 = vmatpush1.bf16.msra.mxu0 %v1936
        %1940 = vmatprep.subr.bf16.mxu0 0
        %1941 = vmatpush1.bf16.msra.mxu0 0
        %1942 = vmatprep.subr.bf16.mxu0 0
        %1943 = vmatpush1.bf16.msra.mxu0 0
        %1944 = vmatprep.subr.bf16.mxu0 0
        %1945 = vmatpush1.bf16.msra.mxu0 0
        %1946 = vmatprep.subr.bf16.mxu0 0
        %1947 = vmatpush1.bf16.msra.mxu0 0
        %1948 = vmatprep.subr.bf16.mxu0 0
        %1949 = vmatpush1.bf16.msra.mxu0 0
        %1950 = vmatprep.subr.bf16.mxu0 0
        %1951 = vmatpush1.bf16.msra.mxu0 0
        %1952 = vmatprep.subr.bf16.mxu0 0
        %1953 = vmatpush1.bf16.msra.mxu0 0
        %1954 = vmatprep.subr.bf16.mxu0 0
        %1955 = vmatpush1.bf16.msra.mxu0 0
        %1956 = vmatprep.subr.bf16.mxu0 0
        %1957 = vmatpush1.bf16.msra.mxu0 0
        %1958 = vmatprep.subr.bf16.mxu0 0
        %1959 = vmatpush1.bf16.msra.mxu0 0
        %1960 = vmatprep.subr.bf16.mxu0 0
        %1961 = vmatpush1.bf16.msra.mxu0 0
        %1962 = vmatprep.subr.bf16.mxu0 0
        %1963 = vmatpush1.bf16.msra.mxu0 0
        %1964 = vmatprep.subr.bf16.mxu0 0
        %1965 = vmatpush1.bf16.msra.mxu0 0
        %1966 = vmatprep.subr.bf16.mxu0 0
        %1967 = vmatpush1.bf16.msra.mxu0 0
        %1968 = vmatprep.subr.bf16.mxu0 0
        %1969 = vmatpush1.bf16.msra.mxu0 0
        %1970 = vmatprep.mubr.bf16.mxu0 0
        %1971 = vmatmul.mubr.bf16.gmra.mrb[0].mxu0 %v1933
        %v1972 = vpop.f32.mrb[0].mxu0
        %v1973 = vadd.f32 0.0, %v1972
        %v1974 = vpop.f32.mrb[0].mxu0
        %v1975 = vpop.f32.mrb[0].mxu0
        %v1976 = vpop.f32.mrb[0].mxu0
        %1977 = vdwg.mxu0
        %v1979 = vsel %vm1638, %v1879, 0
        %v1982 = vsel %vm1888, %v1883, 0
        %1984 = vmatprep.subr.bf16.mxu0 0
        %1985 = vmatpush1.bf16.msra.mxu0 %v1982
        %1986 = vmatprep.subr.bf16.mxu0 0
        %1987 = vmatpush1.bf16.msra.mxu0 0
        %1988 = vmatprep.subr.bf16.mxu0 0
        %1989 = vmatpush1.bf16.msra.mxu0 0
        %1990 = vmatprep.subr.bf16.mxu0 0
        %1991 = vmatpush1.bf16.msra.mxu0 0
        %1992 = vmatprep.subr.bf16.mxu0 0
        %1993 = vmatpush1.bf16.msra.mxu0 0
        %1994 = vmatprep.subr.bf16.mxu0 0
        %1995 = vmatpush1.bf16.msra.mxu0 0
        %1996 = vmatprep.subr.bf16.mxu0 0
        %1997 = vmatpush1.bf16.msra.mxu0 0
        %1998 = vmatprep.subr.bf16.mxu0 0
        %1999 = vmatpush1.bf16.msra.mxu0 0
        %2000 = vmatprep.subr.bf16.mxu0 0
        %2001 = vmatpush1.bf16.msra.mxu0 0
        %2002 = vmatprep.subr.bf16.mxu0 0
        %2003 = vmatpush1.bf16.msra.mxu0 0
        %2004 = vmatprep.subr.bf16.mxu0 0
        %2005 = vmatpush1.bf16.msra.mxu0 0
        %2006 = vmatprep.subr.bf16.mxu0 0
        %2007 = vmatpush1.bf16.msra.mxu0 0
        %2008 = vmatprep.subr.bf16.mxu0 0
        %2009 = vmatpush1.bf16.msra.mxu0 0
        %2010 = vmatprep.subr.bf16.mxu0 0
        %2011 = vmatpush1.bf16.msra.mxu0 0
        %2012 = vmatprep.subr.bf16.mxu0 0
        %2013 = vmatpush1.bf16.msra.mxu0 0
        %2014 = vmatprep.subr.bf16.mxu0 0
        %2015 = vmatpush1.bf16.msra.mxu0 0
        %2016 = vmatprep.mubr.bf16.mxu0 0
        %2017 = vmatmul.mubr.bf16.gmra.mrb[0].mxu0 %v1979
        %v2018 = vpop.f32.mrb[0].mxu0
        %v2019 = vadd.f32 0.0, %v2018
        %v2020 = vpop.f32.mrb[0].mxu0
        %v2021 = vpop.f32.mrb[0].mxu0
        %v2022 = vpop.f32.mrb[0].mxu0
        %2023 = vdwg.mxu0
        %v2025 = vsel %vm1638, %v1880, 0
        %v2028 = vsel %vm1888, %v1884, 0
        %2030 = vmatprep.subr.bf16.mxu0 0
        %2031 = vmatpush1.bf16.msra.mxu0 %v2028
        %2032 = vmatprep.subr.bf16.mxu0 0
        %2033 = vmatpush1.bf16.msra.mxu0 0
        %2034 = vmatprep.subr.bf16.mxu0 0
        %2035 = vmatpush1.bf16.msra.mxu0 0
        %2036 = vmatprep.subr.bf16.mxu0 0
        %2037 = vmatpush1.bf16.msra.mxu0 0
        %2038 = vmatprep.subr.bf16.mxu0 0
        %2039 = vmatpush1.bf16.msra.mxu0 0
        %2040 = vmatprep.subr.bf16.mxu0 0
        %2041 = vmatpush1.bf16.msra.mxu0 0
        %2042 = vmatprep.subr.bf16.mxu0 0
        %2043 = vmatpush1.bf16.msra.mxu0 0
        %2044 = vmatprep.subr.bf16.mxu0 0
        %2045 = vmatpush1.bf16.msra.mxu0 0
        %2046 = vmatprep.subr.bf16.mxu0 0
        %2047 = vmatpush1.bf16.msra.mxu0 0
        %2048 = vmatprep.subr.bf16.mxu0 0
        %2049 = vmatpush1.bf16.msra.mxu0 0
        %2050 = vmatprep.subr.bf16.mxu0 0
        %2051 = vmatpush1.bf16.msra.mxu0 0
        %2052 = vmatprep.subr.bf16.mxu0 0
        %2053 = vmatpush1.bf16.msra.mxu0 0
        %2054 = vmatprep.subr.bf16.mxu0 0
        %2055 = vmatpush1.bf16.msra.mxu0 0
        %2056 = vmatprep.subr.bf16.mxu0 0
        %2057 = vmatpush1.bf16.msra.mxu0 0
        %2058 = vmatprep.subr.bf16.mxu0 0
        %2059 = vmatpush1.bf16.msra.mxu0 0
        %2060 = vmatprep.subr.bf16.mxu0 0
        %2061 = vmatpush1.bf16.msra.mxu0 0
        %2062 = vmatprep.mubr.bf16.mxu0 0
        %2063 = vmatmul.mubr.bf16.gmra.mrb[0].mxu0 %v2025
        %v2064 = vpop.f32.mrb[0].mxu0
        %v2065 = vadd.f32 0.0, %v2064
        %v2066 = vpop.f32.mrb[0].mxu0
        %v2067 = vpop.f32.mrb[0].mxu0
        %v2068 = vpop.f32.mrb[0].mxu0
        %2069 = vdwg.mxu0
        %v2070 = vpack.c.bf16 %v1927, %v1927
        %v2071 = vpack.c.bf16 %v1973, %v1973
        %v2072 = vpack.c.bf16 %v2019, %v2019
        %v2073 = vpack.c.bf16 %v2065, %v2065
        %v2074 = vld [vmem:[%s799] sm:$0xf]
        %v2075 = vld [vmem:[%s799 + $0x4] sm:$0xf]
        %v2076 = vld [vmem:[%s799 + $0x8] sm:$0xf]
        %v2077 = vld [vmem:[%s799 + $0xc] sm:$0xf]
        %v2079 = vsel %vm1638, %v2070, 0
        %v2082 = vsel %vm1888, %v2074, 0
        %2084 = vmatprep.subr.bf16.mxu0 0
        %2085 = vmatpush1.bf16.msra.mxu0 %v2082
        %2086 = vmatprep.subr.bf16.mxu0 0
        %2087 = vmatpush1.bf16.msra.mxu0 0
        %2088 = vmatprep.subr.bf16.mxu0 0
        %2089 = vmatpush1.bf16.msra.mxu0 0
        %2090 = vmatprep.subr.bf16.mxu0 0
        %2091 = vmatpush1.bf16.msra.mxu0 0
        %2092 = vmatprep.subr.bf16.mxu0 0
        %2093 = vmatpush1.bf16.msra.mxu0 0
        %2094 = vmatprep.subr.bf16.mxu0 0
        %2095 = vmatpush1.bf16.msra.mxu0 0
        %2096 = vmatprep.subr.bf16.mxu0 0
        %2097 = vmatpush1.bf16.msra.mxu0 0
        %2098 = vmatprep.subr.bf16.mxu0 0
        %2099 = vmatpush1.bf16.msra.mxu0 0
        %2100 = vmatprep.subr.bf16.mxu0 0
        %2101 = vmatpush1.bf16.msra.mxu0 0
        %2102 = vmatprep.subr.bf16.mxu0 0
        %2103 = vmatpush1.bf16.msra.mxu0 0
        %2104 = vmatprep.subr.bf16.mxu0 0
        %2105 = vmatpush1.bf16.msra.mxu0 0
        %2106 = vmatprep.subr.bf16.mxu0 0
        %2107 = vmatpush1.bf16.msra.mxu0 0
        %2108 = vmatprep.subr.bf16.mxu0 0
        %2109 = vmatpush1.bf16.msra.mxu0 0
        %2110 = vmatprep.subr.bf16.mxu0 0
        %2111 = vmatpush1.bf16.msra.mxu0 0
        %2112 = vmatprep.subr.bf16.mxu0 0
        %2113 = vmatpush1.bf16.msra.mxu0 0
        %2114 = vmatprep.subr.bf16.mxu0 0
        %2115 = vmatpush1.bf16.msra.mxu0 0
        %2116 = vmatprep.mubr.bf16.mxu0 0
        %2117 = vmatmul.mubr.bf16.gmra.mrb[0].mxu0 %v2079
        %v2118 = vpop.f32.mrb[0].mxu0
        %v2119 = vadd.f32 0.0, %v2118
        %v2120 = vpop.f32.mrb[0].mxu0
        %v2121 = vpop.f32.mrb[0].mxu0
        %v2122 = vpop.f32.mrb[0].mxu0
        %2123 = vdwg.mxu0
        %v2125 = vsel %vm1638, %v2071, 0
        %v2128 = vsel %vm1888, %v2075, 0
        %2130 = vmatprep.subr.bf16.mxu0 0
        %2131 = vmatpush1.bf16.msra.mxu0 %v2128
        %2132 = vmatprep.subr.bf16.mxu0 0
        %2133 = vmatpush1.bf16.msra.mxu0 0
        %2134 = vmatprep.subr.bf16.mxu0 0
        %2135 = vmatpush1.bf16.msra.mxu0 0
        %2136 = vmatprep.subr.bf16.mxu0 0
        %2137 = vmatpush1.bf16.msra.mxu0 0
        %2138 = vmatprep.subr.bf16.mxu0 0
        %2139 = vmatpush1.bf16.msra.mxu0 0
        %2140 = vmatprep.subr.bf16.mxu0 0
        %2141 = vmatpush1.bf16.msra.mxu0 0
        %2142 = vmatprep.subr.bf16.mxu0 0
        %2143 = vmatpush1.bf16.msra.mxu0 0
        %2144 = vmatprep.subr.bf16.mxu0 0
        %2145 = vmatpush1.bf16.msra.mxu0 0
        %2146 = vmatprep.subr.bf16.mxu0 0
        %2147 = vmatpush1.bf16.msra.mxu0 0
        %2148 = vmatprep.subr.bf16.mxu0 0
        %2149 = vmatpush1.bf16.msra.mxu0 0
        %2150 = vmatprep.subr.bf16.mxu0 0
        %2151 = vmatpush1.bf16.msra.mxu0 0
        %2152 = vmatprep.subr.bf16.mxu0 0
        %2153 = vmatpush1.bf16.msra.mxu0 0
        %2154 = vmatprep.subr.bf16.mxu0 0
        %2155 = vmatpush1.bf16.msra.mxu0 0
        %2156 = vmatprep.subr.bf16.mxu0 0
        %2157 = vmatpush1.bf16.msra.mxu0 0
        %2158 = vmatprep.subr.bf16.mxu0 0
        %2159 = vmatpush1.bf16.msra.mxu0 0
        %2160 = vmatprep.subr.bf16.mxu0 0
        %2161 = vmatpush1.bf16.msra.mxu0 0
        %2162 = vmatprep.mubr.bf16.mxu0 0
        %2163 = vmatmul.mubr.bf16.gmra.mrb[0].mxu0 %v2125
        %v2164 = vpop.f32.mrb[0].mxu0
        %v2165 = vadd.f32 0.0, %v2164
        %v2166 = vpop.f32.mrb[0].mxu0
        %v2167 = vpop.f32.mrb[0].mxu0
        %v2168 = vpop.f32.mrb[0].mxu0
        %2169 = vdwg.mxu0
        %v2171 = vsel %vm1638, %v2072, 0
        %v2174 = vsel %vm1888, %v2076, 0
        %2176 = vmatprep.subr.bf16.mxu0 0
        %2177 = vmatpush1.bf16.msra.mxu0 %v2174
        %2178 = vmatprep.subr.bf16.mxu0 0
        %2179 = vmatpush1.bf16.msra.mxu0 0
        %2180 = vmatprep.subr.bf16.mxu0 0
        %2181 = vmatpush1.bf16.msra.mxu0 0
        %2182 = vmatprep.subr.bf16.mxu0 0
        %2183 = vmatpush1.bf16.msra.mxu0 0
        %2184 = vmatprep.subr.bf16.mxu0 0
        %2185 = vmatpush1.bf16.msra.mxu0 0
        %2186 = vmatprep.subr.bf16.mxu0 0
        %2187 = vmatpush1.bf16.msra.mxu0 0
        %2188 = vmatprep.subr.bf16.mxu0 0
        %2189 = vmatpush1.bf16.msra.mxu0 0
        %2190 = vmatprep.subr.bf16.mxu0 0
        %2191 = vmatpush1.bf16.msra.mxu0 0
        %2192 = vmatprep.subr.bf16.mxu0 0
        %2193 = vmatpush1.bf16.msra.mxu0 0
        %2194 = vmatprep.subr.bf16.mxu0 0
        %2195 = vmatpush1.bf16.msra.mxu0 0
        %2196 = vmatprep.subr.bf16.mxu0 0
        %2197 = vmatpush1.bf16.msra.mxu0 0
        %2198 = vmatprep.subr.bf16.mxu0 0
        %2199 = vmatpush1.bf16.msra.mxu0 0
        %2200 = vmatprep.subr.bf16.mxu0 0
        %2201 = vmatpush1.bf16.msra.mxu0 0
        %2202 = vmatprep.subr.bf16.mxu0 0
        %2203 = vmatpush1.bf16.msra.mxu0 0
        %2204 = vmatprep.subr.bf16.mxu0 0
        %2205 = vmatpush1.bf16.msra.mxu0 0
        %2206 = vmatprep.subr.bf16.mxu0 0
        %2207 = vmatpush1.bf16.msra.mxu0 0
        %2208 = vmatprep.mubr.bf16.mxu0 0
        %2209 = vmatmul.mubr.bf16.gmra.mrb[0].mxu0 %v2171
        %v2210 = vpop.f32.mrb[0].mxu0
        %v2211 = vadd.f32 0.0, %v2210
        %v2212 = vpop.f32.mrb[0].mxu0
        %v2213 = vpop.f32.mrb[0].mxu0
        %v2214 = vpop.f32.mrb[0].mxu0
        %2215 = vdwg.mxu0
        %v2217 = vsel %vm1638, %v2073, 0
        %v2220 = vsel %vm1888, %v2077, 0
        %2222 = vmatprep.subr.bf16.mxu0 0
        %2223 = vmatpush1.bf16.msra.mxu0 %v2220
        %2224 = vmatprep.subr.bf16.mxu0 0
        %2225 = vmatpush1.bf16.msra.mxu0 0
        %2226 = vmatprep.subr.bf16.mxu0 0
        %2227 = vmatpush1.bf16.msra.mxu0 0
        %2228 = vmatprep.subr.bf16.mxu0 0
        %2229 = vmatpush1.bf16.msra.mxu0 0
        %2230 = vmatprep.subr.bf16.mxu0 0
        %2231 = vmatpush1.bf16.msra.mxu0 0
        %2232 = vmatprep.subr.bf16.mxu0 0
        %2233 = vmatpush1.bf16.msra.mxu0 0
        %2234 = vmatprep.subr.bf16.mxu0 0
        %2235 = vmatpush1.bf16.msra.mxu0 0
        %2236 = vmatprep.subr.bf16.mxu0 0
        %2237 = vmatpush1.bf16.msra.mxu0 0
        %2238 = vmatprep.subr.bf16.mxu0 0
        %2239 = vmatpush1.bf16.msra.mxu0 0
        %2240 = vmatprep.subr.bf16.mxu0 0
        %2241 = vmatpush1.bf16.msra.mxu0 0
        %2242 = vmatprep.subr.bf16.mxu0 0
        %2243 = vmatpush1.bf16.msra.mxu0 0
        %2244 = vmatprep.subr.bf16.mxu0 0
        %2245 = vmatpush1.bf16.msra.mxu0 0
        %2246 = vmatprep.subr.bf16.mxu0 0
        %2247 = vmatpush1.bf16.msra.mxu0 0
        %2248 = vmatprep.subr.bf16.mxu0 0
        %2249 = vmatpush1.bf16.msra.mxu0 0
        %2250 = vmatprep.subr.bf16.mxu0 0
        %2251 = vmatpush1.bf16.msra.mxu0 0
        %2252 = vmatprep.subr.bf16.mxu0 0
        %2253 = vmatpush1.bf16.msra.mxu0 0
        %2254 = vmatprep.mubr.bf16.mxu0 0
        %2255 = vmatmul.mubr.bf16.gmra.mrb[0].mxu0 %v2217
        %v2256 = vpop.f32.mrb[0].mxu0
        %v2257 = vadd.f32 0.0, %v2256
        %v2258 = vpop.f32.mrb[0].mxu0
        %v2259 = vpop.f32.mrb[0].mxu0
        %v2260 = vpop.f32.mrb[0].mxu0
        %2261 = vdwg.mxu0
        %v2262 = vsel %vm836, %v2119, 0.0
        %v2263 = vsel %vm836, %v2165, 0.0
        %v2264 = vadd.f32 %v2262, %v2263
        %v2265 = vsel %vm836, %v2211, 0.0
        %v2266 = vadd.f32 %v2264, %v2265
        %v2267 = vsel %vm836, %v2257, 0.0
        %v2268 = vadd.f32 %v2266, %v2267
        %v2269 = vld [vmem:[%s802] sm:$0x1]
        %v2271 = vlaneseq
        %v2272 = vshrl.u32 %v2271, 7
        %v2273 = vsub.s32 0, %v2272
        %v2274 = vrot.slane %v2269, %v2273
        %v2276 = vadd.f32 %v2268, %v2274
        %v2277 = vadd.f32 %v833, %v2276
        %v2278 = vld [vmem:[%s805] sm:$0x1]
        %v2279 = vld [vmem:[%s808] sm:$0x1]
        %v2280 = vsel %vm836, %v2277, 0.0
        %2281 = vadd.xlane.f32.xlu0 %v2280
        %v2282 = vpop.xlane.xlu0 %2281
        %v2283 = vmul.f32 %v2282, %v840
        %v2284 = vsub.f32 %v2277, %v2283
        %v2285 = vmul.f32 %v2284, %v2284
        %v2286 = vsel %vm836, %v2285, 0.0
        %2287 = vadd.xlane.f32.xlu0 %v2286
        %v2288 = vpop.xlane.xlu0 %2287
        %v2289 = vmul.f32 %v2288, %v840
        %v2290 = vadd.f32 %v2289, 1e-05
        %v2291 = vrsqrt.pop %v2290
        %v2292 = vmul.f32 %v2284, %v2291
        %v2294 = vlaneseq
        %v2295 = vshrl.u32 %v2294, 7
        %v2296 = vsub.s32 0, %v2295
        %v2297 = vrot.slane %v2278, %v2296
        %v2299 = vmul.f32 %v2292, %v2297
        %v2301 = vlaneseq
        %v2302 = vshrl.u32 %v2301, 7
        %v2303 = vsub.s32 0, %v2302
        %v2304 = vrot.slane %v2279, %v2303
        %v2306 = vadd.f32 %v2299, %v2304
        %v2307 = vpack.c.bf16 %v2306, %v2306
        %v2308 = vld [vmem:[%s813] sm:$0xf]
        %v2309 = vld [vmem:[%s813 + $0x4] sm:$0xf]
        %v2310 = vld [vmem:[%s813 + $0x8] sm:$0xf]
        %v2311 = vld [vmem:[%s813 + $0xc] sm:$0xf]
        %v2312 = vld [vmem:[%s816] sm:$0x1]
        %v2314 = vlaneseq
        %v2315 = vshrl.u32 %v2314, 7
        %v2316 = vsub.s32 0, %v2315
        %v2317 = vrot.slane %v2312, %v2316
        %v2323 = vunpack.c.l.b16 %v2308
        %v2324 = vunpack.c.l.b16 %v2309
        %v2325 = vunpack.c.l.b16 %v2310
        %v2326 = vunpack.c.l.b16 %v2311
        %v2327 = vpack.c.b16 %v2324, %v2323
        %v2328 = vpack.c.b16 %v2326, %v2325
        %v2332 = vsel %vm836, %v2307, 0
        %2334 = vmatprep.subr.bf16.mxu0 0
        %2335 = vmatpush1.bf16.msra.mxu0 %v2327
        %2336 = vmatprep.subr.bf16.mxu0 0
        %2337 = vmatpush1.bf16.msra.mxu0 %v2328
        %2338 = vmatprep.subr.bf16.mxu0 0
        %2339 = vmatpush1.bf16.msra.mxu0 0
        %2340 = vmatprep.subr.bf16.mxu0 0
        %2341 = vmatpush1.bf16.msra.mxu0 0
        %2342 = vmatprep.subr.bf16.mxu0 0
        %2343 = vmatpush1.bf16.msra.mxu0 0
        %2344 = vmatprep.subr.bf16.mxu0 0
        %2345 = vmatpush1.bf16.msra.mxu0 0
        %2346 = vmatprep.subr.bf16.mxu0 0
        %2347 = vmatpush1.bf16.msra.mxu0 0
        %2348 = vmatprep.subr.bf16.mxu0 0
        %2349 = vmatpush1.bf16.msra.mxu0 0
        %2350 = vmatprep.subr.bf16.mxu0 0
        %2351 = vmatpush1.bf16.msra.mxu0 0
        %2352 = vmatprep.subr.bf16.mxu0 0
        %2353 = vmatpush1.bf16.msra.mxu0 0
        %2354 = vmatprep.subr.bf16.mxu0 0
        %2355 = vmatpush1.bf16.msra.mxu0 0
        %2356 = vmatprep.subr.bf16.mxu0 0
        %2357 = vmatpush1.bf16.msra.mxu0 0
        %2358 = vmatprep.subr.bf16.mxu0 0
        %2359 = vmatpush1.bf16.msra.mxu0 0
        %2360 = vmatprep.subr.bf16.mxu0 0
        %2361 = vmatpush1.bf16.msra.mxu0 0
        %2362 = vmatprep.subr.bf16.mxu0 0
        %2363 = vmatpush1.bf16.msra.mxu0 0
        %2364 = vmatprep.subr.bf16.mxu0 0
        %2365 = vmatpush1.bf16.msra.mxu0 0
        %2366 = vmatprep.mubr.bf16.mxu0 0
        %2367 = vmatmul.mubr.bf16.gmra.mrb[0].mxu0 %v2332
        %v2368 = vpop.f32.mrb[0].mxu0
        %v2369 = vadd.f32 %v2317, %v2368
        %v2370 = vpop.f32.mrb[0].mxu0
        %v2371 = vpop.f32.mrb[0].mxu0
        %v2372 = vpop.f32.mrb[0].mxu0
        %2373 = vdwg.mxu0
        %v2374 = vmul.f32 %v2369, %v2369
        %v2375 = vmul.f32 %v2369, %v2374
        %v2376 = vmul.f32 %v2375, 0.044715
        %v2377 = vadd.f32 %v2369, %v2376
        %v2378 = vmul.f32 %v2377, 0.7978846
        %v2379 = vtanh.pop %v2378
        %v2380 = vadd.f32 %v2379, 1.0
        %v2381 = vmul.f32 %v2380, 0.5
        %v2382 = vmul.f32 %v2369, %v2381
        %v2383 = vpack.c.bf16 %v2382, %v2382
        %v2384 = vld [vmem:[%s821] sm:$0xf]
        %v2385 = vld [vmem:[%s821 + $0x4] sm:$0xf]
        %v2386 = vld [vmem:[%s821 + $0x8] sm:$0xf]
        %v2387 = vld [vmem:[%s821 + $0xc] sm:$0xf]
        %v2388 = vld [vmem:[%s821 + $0x10] sm:$0xf]
        %v2389 = vld [vmem:[%s821 + $0x14] sm:$0xf]
        %v2390 = vld [vmem:[%s821 + $0x18] sm:$0xf]
        %v2391 = vld [vmem:[%s821 + $0x1c] sm:$0xf]
        %v2392 = vld [vmem:[%s824] sm:$0x1]
        %v2394 = vlaneseq
        %v2395 = vshrl.u32 %v2394, 7
        %v2396 = vsub.s32 0, %v2395
        %v2397 = vrot.slane %v2392, %v2396
        %v2407 = vunpack.c.l.b16 %v2384
        %v2408 = vunpack.c.l.b16 %v2385
        %v2409 = vunpack.c.l.b16 %v2386
        %v2410 = vunpack.c.l.b16 %v2387
        %v2411 = vunpack.c.l.b16 %v2388
        %v2412 = vunpack.c.l.b16 %v2389
        %v2413 = vunpack.c.l.b16 %v2390
        %v2414 = vunpack.c.l.b16 %v2391
        %v2415 = vpack.c.b16 %v2408, %v2407
        %v2416 = vpack.c.b16 %v2410, %v2409
        %v2417 = vpack.c.b16 %v2412, %v2411
        %v2418 = vpack.c.b16 %v2414, %v2413
        %vm2423 = vcmask 523264
        %v2425 = vsel %vm2423, %v2383, 0
        %2427 = vmatprep.subr.bf16.mxu0 0
        %2428 = vmatpush1.bf16.msra.mxu0 %v2415
        %2429 = vmatprep.subr.bf16.mxu0 0
        %2430 = vmatpush1.bf16.msra.mxu0 %v2416
        %2431 = vmatprep.subr.bf16.mxu0 0
        %2432 = vmatpush1.bf16.msra.mxu0 %v2417
        %2433 = vmatprep.subr.bf16.mxu0 0
        %2434 = vmatpush1.bf16.msra.mxu0 %v2418
        %2435 = vmatprep.subr.bf16.mxu0 0
        %2436 = vmatpush1.bf16.msra.mxu0 0
        %2437 = vmatprep.subr.bf16.mxu0 0
        %2438 = vmatpush1.bf16.msra.mxu0 0
        %2439 = vmatprep.subr.bf16.mxu0 0
        %2440 = vmatpush1.bf16.msra.mxu0 0
        %2441 = vmatprep.subr.bf16.mxu0 0
        %2442 = vmatpush1.bf16.msra.mxu0 0
        %2443 = vmatprep.subr.bf16.mxu0 0
        %2444 = vmatpush1.bf16.msra.mxu0 0
        %2445 = vmatprep.subr.bf16.mxu0 0
        %2446 = vmatpush1.bf16.msra.mxu0 0
        %2447 = vmatprep.subr.bf16.mxu0 0
        %2448 = vmatpush1.bf16.msra.mxu0 0
        %2449 = vmatprep.subr.bf16.mxu0 0
        %2450 = vmatpush1.bf16.msra.mxu0 0
        %2451 = vmatprep.subr.bf16.mxu0 0
        %2452 = vmatpush1.bf16.msra.mxu0 0
        %2453 = vmatprep.subr.bf16.mxu0 0
        %2454 = vmatpush1.bf16.msra.mxu0 0
        %2455 = vmatprep.subr.bf16.mxu0 0
        %2456 = vmatpush1.bf16.msra.mxu0 0
        %2457 = vmatprep.subr.bf16.mxu0 0
        %2458 = vmatpush1.bf16.msra.mxu0 0
        %2459 = vmatprep.mubr.bf16.mxu0 0
        %2460 = vmatmul.mubr.bf16.gmra.mrb[0].mxu0 %v2425
        %v2461 = vpop.f32.mrb[0].mxu0
        %v2462 = vadd.f32 %v2397, %v2461
        %v2463 = vpop.f32.mrb[0].mxu0
        %v2464 = vpop.f32.mrb[0].mxu0
        %v2465 = vpop.f32.mrb[0].mxu0
        %2466 = vdwg.mxu0
        %v2467 = vadd.f32 %v2277, %v2462
        %2468 = vst.msk [vmem:[#allocation2] sm:$0xff] %vm836, %v2467
        %p2469 = scmp.eq.s32.totalorder %s36, 1
        // Predicated region
        $region93: #{tpu_custom_call.1} parent=87 // pred_check
          %p2470 = pneg %p2469
        $region94: #{tpu_custom_call.1} parent=87 // pred_check_branch
          %2472 = sbr.rel (%p2470) target = $region96
        $region95: #{tpu_custom_call.1} parent=87 // pred_region
          %2473 = vst.msk [vmem:[%s757] sm:$0xff] %vm836, %v2467
        $region96: #{tpu_custom_call.1} parent=87 // pred_fallthru
          _
        %s2474 = sand.u32 %s493, 1
        %s2475 = scalar_lea.sflag [#allocation4], %s2474
        %s2476 = sand.u32 %s493, 1
        %s2477 = smul.addr %s2476, 8
        %s2478 = scalar_lea.vmem [#allocation3], %s2477
        // Predicated region
        $region97: #{tpu_custom_call.1} parent=87 // pred_check
          %p2479 = pneg %p503
        $region98: #{tpu_custom_call.1} parent=87 // pred_check_branch
          %2481 = sbr.rel (%p2479) target = $region100
        $region99: #{tpu_custom_call.1} parent=87 // pred_region
          %s2483 = ssub.s32 128, 128
          %2484 = vsyncadd %s2475, %s2483
          %s2485 = smul.addr %s35, 128
          %s2486 = scalar_lea.hbm %s17, %s2485
          %s2488 = sshll.u32 %s2478, 4
          %s2489 = int_to_ptr.vmem [resolvable:$true] %s2488
          %2491 = dma.vmem_to_hbm [thread:$0]  %s2489, 128, %s2486, %s2475
        $region100: #{tpu_custom_call.1} parent=87 // pred_fallthru
          _
      $region88: #{tpu_custom_call.1} parent=5 // pred_fallthru
        _
      %p2492 = scmp.le.s32.totalorder 2, %s26
      // Predicated region
      $region101: #{tpu_custom_call.1} parent=5 // pred_check
        %p2493 = pneg %p2492
      $region102: #{tpu_custom_call.1} parent=5 // pred_check_branch
        %2495 = sbr.rel (%p2493) target = $region104
      $region103: #{tpu_custom_call.1} parent=5 // pred_region
        %s2496 = ssub.s32 %s26, 2
        // Predicated region
        $region105: #{tpu_custom_call.1} parent=103 // pred_check
          %p2497 = pneg %p509
        $region106: #{tpu_custom_call.1} parent=103 // pred_check_branch
          %2499 = sbr.rel (%p2497) target = $region108
        $region107: #{tpu_custom_call.1} parent=103 // pred_region
          %s2500 = sand.u32 %s494, 1
          %s2501 = scalar_lea.sflag [#allocation4], %s2500
          %s2502 = sand.u32 %s494, 1
          %s2503 = smul.addr %s2502, 8
          %s2504 = scalar_lea.vmem [#allocation3], %s2503
          %2505 = dma.done %s2501, 128
        $region108: #{tpu_custom_call.1} parent=103 // pred_fallthru
          _
      $region104: #{tpu_custom_call.1} parent=5 // pred_fallthru
        _
    $region6: #{tpu_custom_call.1} parent=1 // loop_footer
      %s30 = sadd.s32 1, %s26
    $region7: #{tpu_custom_call.1} parent=1 // loop_footer_branch
      %25 = sbr.rel target = $region3
    $region8: #{tpu_custom_call.1} parent=1 // loop_exit
      _
    %2506 = vsyncpa [#allocation4], 1
    %s2507 = scalar_lea.sflag [#allocation4], 1
    %2508 = vsyncpa %s2507, 1

</llo_original>
